<compile_context>
chip_gen: v7x
topology: tpu7x:2x2x1
jax: 0.10.0
libtpu: 0.0.40
codegen_flags: <defaults>
</compile_context>

<pallas_src>
import functools
import math

import jax
import jax.numpy as jnp
from jax import lax
from jax.experimental import pallas as pl
from jax.experimental.pallas import tpu as pltpu


def _pick_batch_tile(n, target):
    """Largest divisor of n that is <= target."""
    t = min(n, target)
    while n % t != 0:
        t -= 1
    return t


def _pick_seq_tile(n, target):
    """Largest divisor of n that is <= target and sublane-friendly
    (multiple of 8), falling back to the full extent."""
    for cand in range(min(n, target), 0, -1):
        if n % cand == 0 and (cand % 8 == 0 or cand == n):
            return cand
    return n


# ---------------- pass 1: gate = tanh(fc2(relu(fc1(LN(mean_N(x)))))) --------
def _se_gate_kernel(x_ref, ln_w_ref, ln_b_ref, w1_ref, b1_ref, w2_ref, b2_ref,
                    gate_ref, acc_ref, *, seq_len, eps):
    n = pl.program_id(1)

    @pl.when(n == 0)
    def _():
        acc_ref[...] = jnp.zeros_like(acc_ref)

    # partial sum of this sequence tile: (TB, TN, D) -> (TB, D)
    acc_ref[...] += jnp.sum(x_ref[...].astype(jnp.float32), axis=1)

    @pl.when(n == pl.num_programs(1) - 1)
    def _():
        a = acc_ref[...] * (1.0 / seq_len)                       # mean over N
        # LayerNorm over features (PyTorch default eps=1e-5, biased variance)
        mu = jnp.mean(a, axis=-1, keepdims=True)
        var = jnp.mean(jnp.square(a - mu), axis=-1, keepdims=True)
        a = (a - mu) * lax.rsqrt(var + eps)
        a = a * ln_w_ref[...] + ln_b_ref[...]
        # fc1 + ReLU
        h = jnp.dot(a, w1_ref[...], preferred_element_type=jnp.float32,
                    precision=lax.Precision.HIGHEST)
        h = jnp.maximum(h + b1_ref[...], 0.0)
        # fc2 + tanh
        g = jnp.dot(h, w2_ref[...], preferred_element_type=jnp.float32,
                    precision=lax.Precision.HIGHEST)
        g = jnp.tanh(g + b2_ref[...])
        gate_ref[...] = g[:, None, :].astype(gate_ref.dtype)


# ---------------- pass 2: y = gate * x  (broadcast over sequence) -----------
def _se_scale_kernel(x_ref, gate_ref, o_ref):
    o_ref[...] = (x_ref[...].astype(jnp.float32) * gate_ref[...]).astype(
        o_ref.dtype)


def se_forward(x, ln_w, ln_b, w1, b1, w2, b2, *,
               tb=8, tn_reduce=256, tn_scale=512, eps=1e-5):
    """x: (B, N, D).  ln_w/ln_b: (D,).  w1: (D, H), b1: (H,), w2: (H, D),
    b2: (D,).  Returns (B, N, D)."""
    B, N, D = x.shape
    H = w1.shape[1]
    assert w1.shape == (D, H) and w2.shape == (H, D)

    TB = _pick_batch_tile(B, tb)
    TNr = _pick_seq_tile(N, tn_reduce)
    TNs = _pick_seq_tile(N, tn_scale)

    ln_w2d = ln_w.reshape(1, D)
    ln_b2d = ln_b.reshape(1, D)
    b1_2d = b1.reshape(1, H)
    b2_2d = b2.reshape(1, D)

    itemsize = x.dtype.itemsize

    # ---- pass 1: per-batch gate (B, 1, D), f32 ----
    gate = pl.pallas_call(
        functools.partial(_se_gate_kernel, seq_len=N, eps=eps),
        out_shape=jax.ShapeDtypeStruct((B, 1, D), jnp.float32),
        grid_spec=pltpu.PrefetchScalarGridSpec(
            num_scalar_prefetch=0,
            grid=(B // TB, N // TNr),
            in_specs=[
                pl.BlockSpec((TB, TNr, D), lambda b, n: (b, n, 0)),  # x tiles
                pl.BlockSpec((1, D), lambda b, n: (0, 0)),           # LN gamma
                pl.BlockSpec((1, D), lambda b, n: (0, 0)),           # LN beta
                pl.BlockSpec((D, H), lambda b, n: (0, 0)),           # w1
                pl.BlockSpec((1, H), lambda b, n: (0, 0)),           # b1
                pl.BlockSpec((H, D), lambda b, n: (0, 0)),           # w2
                pl.BlockSpec((1, D), lambda b, n: (0, 0)),           # b2
            ],
            out_specs=pl.BlockSpec((TB, 1, D), lambda b, n: (b, 0, 0)),
            scratch_shapes=[pltpu.VMEM((TB, D), jnp.float32)],
        ),
        compiler_params=pltpu.CompilerParams(
            dimension_semantics=("parallel", "arbitrary")),
        cost_estimate=pl.CostEstimate(
            flops=B * N * D + 4 * B * D * H + 8 * B * D,
            transcendentals=B * D,
            bytes_accessed=(x.size * itemsize + 2 * D * H * 4
                            + (2 * D + H) * 4 + B * D * 4),
        ),
    )(x, ln_w2d, ln_b2d, w1, b1_2d, w2, b2_2d)

    # ---- pass 2: broadcast multiply, fully parallel + pipelined ----
    out = pl.pallas_call(
        _se_scale_kernel,
        out_shape=jax.ShapeDtypeStruct((B, N, D), x.dtype),
        grid_spec=pltpu.PrefetchScalarGridSpec(
            num_scalar_prefetch=0,
            grid=(B // TB, N // TNs),
            in_specs=[
                pl.BlockSpec((TB, TNs, D), lambda b, n: (b, n, 0)),  # x tiles
                pl.BlockSpec((TB, 1, D), lambda b, n: (b, 0, 0)),    # gate
            ],
            out_specs=pl.BlockSpec((TB, TNs, D), lambda b, n: (b, n, 0)),
        ),
        compiler_params=pltpu.CompilerParams(
            dimension_semantics=("parallel", "parallel")),
        cost_estimate=pl.CostEstimate(
            flops=B * N * D,
            transcendentals=0,
            bytes_accessed=2 * x.size * itemsize + B * D * 4,
        ),
    )(x, gate)

    return out


def init_se_params(key, dim, hidden_dim, dtype=jnp.float32):
    """Mimics PyTorch defaults: LayerNorm weight=1 / bias=0; nn.Linear
    uniform(+-1/sqrt(fan_in)) for weight and bias."""
    k1, k2, k3, k4 = jax.random.split(key, 4)
    ln_w = jnp.ones((dim,), dtype)
    ln_b = jnp.zeros((dim,), dtype)
    bound1 = 1.0 / math.sqrt(dim)
    bound2 = 1.0 / math.sqrt(hidden_dim)
    # linear weights stored as (in, out), i.e. transposed vs PyTorch's (out, in)
    w1 = jax.random.uniform(k1, (dim, hidden_dim), dtype, -bound1, bound1)
    b1 = jax.random.uniform(k2, (hidden_dim,), dtype, -bound1, bound1)
    w2 = jax.random.uniform(k3, (hidden_dim, dim), dtype, -bound2, bound2)
    b2 = jax.random.uniform(k4, (dim,), dtype, -bound2, bound2)
    return ln_w, ln_b, w1, b1, w2, b2


if __name__ == "__main__":
    key = jax.random.PRNGKey(0)
    kx, kp = jax.random.split(key)

    # small shapes consistent with SE over a token sequence; lane-dense D
    B, N, dim = 2, 16, 128
    hidden_ratio = 1
    hidden_dim = int(dim * hidden_ratio)

    x = jax.random.normal(kx, (B, N, dim), dtype=jnp.float32)
    ln_w, ln_b, w1, b1, w2, b2 = init_se_params(kp, dim, hidden_dim)

    # small seq tiles so the demo exercises the multi-tile reduction + scale
    y = se_forward(x, ln_w, ln_b, w1, b1, w2, b2, tn_reduce=8, tn_scale=8)
    y = jax.block_until_ready(y)

    # reference in plain JAX
    a = jnp.mean(x, axis=1, keepdims=True)                       # (B, 1, D)
    mu = jnp.mean(a, axis=-1, keepdims=True)
    var = jnp.mean(jnp.square(a - mu), axis=-1, keepdims=True)
    a_ln = (a - mu) / jnp.sqrt(var + 1e-5) * ln_w + ln_b
    h_ref = jnp.maximum(
        jnp.dot(a_ln, w1, precision=lax.Precision.HIGHEST) + b1, 0.0)
    g_ref = jnp.tanh(
        jnp.dot(h_ref, w2, precision=lax.Precision.HIGHEST) + b2)
    y_ref = g_ref * x

    assert y.shape == (B, N, dim)
    assert jnp.allclose(y, y_ref, atol=1e-4, rtol=1e-4)

    print("KERNEL_OK")
</pallas_src>

<mosaic_0001>
module attributes {stable_mosaic.version = 11 : i64} {
  func.func @_se_gate_kernel(%arg0: i32, %arg1: i32, %arg2: memref<2x8x128xf32, #tpu.memory_space<vmem>>, %arg3: memref<1x128xf32, #tpu.memory_space<vmem>>, %arg4: memref<1x128xf32, #tpu.memory_space<vmem>>, %arg5: memref<128x128xf32, #tpu.memory_space<vmem>>, %arg6: memref<1x128xf32, #tpu.memory_space<vmem>>, %arg7: memref<128x128xf32, #tpu.memory_space<vmem>>, %arg8: memref<1x128xf32, #tpu.memory_space<vmem>>, %arg9: memref<2x1x128xf32, #tpu.memory_space<vmem>>, %arg10: memref<2x128xf32, #tpu.memory_space<vmem>>) attributes {dimension_semantics = [#tpu.dimension_semantics<parallel>, #tpu.dimension_semantics<arbitrary>], iteration_bounds = array<i64: 1, 2>, scalar_prefetch = 0 : i64, scratch_operands = 1 : i64, tpu.core_type = #tpu.core_type<tc>, window_params = [{transform_indices = @transform_0, window_bounds = array<i64: 2, 8, 128>}, {pipeline_mode = #tpu.pipeline_mode<synchronous>, transform_indices = @transform_1, window_bounds = array<i64: 1, 128>}, {pipeline_mode = #tpu.pipeline_mode<synchronous>, transform_indices = @transform_2, window_bounds = array<i64: 1, 128>}, {pipeline_mode = #tpu.pipeline_mode<synchronous>, transform_indices = @transform_3, window_bounds = array<i64: 128, 128>}, {pipeline_mode = #tpu.pipeline_mode<synchronous>, transform_indices = @transform_4, window_bounds = array<i64: 1, 128>}, {pipeline_mode = #tpu.pipeline_mode<synchronous>, transform_indices = @transform_5, window_bounds = array<i64: 128, 128>}, {pipeline_mode = #tpu.pipeline_mode<synchronous>, transform_indices = @transform_6, window_bounds = array<i64: 1, 128>}, {transform_indices = @transform_7, window_bounds = array<i64: 2, 1, 128>}]} {
    %c0_i32 = arith.constant 0 : i32
    %0 = arith.cmpi eq, %arg1, %c0_i32 : i32
    %1 = arith.extui %0 : i1 to i32
    %c0_i32_0 = arith.constant 0 : i32
    %2 = arith.cmpi ne, %1, %c0_i32_0 : i32
    scf.if %2 {
      %cst_8 = arith.constant 0.000000e+00 : f32
      %11 = vector.broadcast %cst_8 : f32 to vector<2x128xf32>
      %c0_9 = arith.constant 0 : index
      %c0_10 = arith.constant 0 : index
      %12 = vector.load %arg10[%c0_9, %c0_10] : memref<2x128xf32, #tpu.memory_space<vmem>>, vector<2x128xf32>
      tpu.vector_store %arg10[%c0_9, %c0_10], %11 {strides = array<i32>} : memref<2x128xf32, #tpu.memory_space<vmem>>, vector<2x128xf32>,
    } else {
    }
    %c0 = arith.constant 0 : index
    %c0_1 = arith.constant 0 : index
    %3 = vector.load %arg10[%c0, %c0_1] : memref<2x128xf32, #tpu.memory_space<vmem>>, vector<2x128xf32>
    %c0_2 = arith.constant 0 : index
    %c0_3 = arith.constant 0 : index
    %c0_4 = arith.constant 0 : index
    %4 = vector.load %arg2[%c0_2, %c0_3, %c0_4] : memref<2x8x128xf32, #tpu.memory_space<vmem>>, vector<2x8x128xf32>
    %cst = arith.constant dense<0.000000e+00> : vector<2x128xf32>
    %5 = vector.multi_reduction <add>, %4, %cst [1] : vector<2x8x128xf32> to vector<2x128xf32>
    %6 = arith.addf %3, %5 : vector<2x128xf32>
    %c0_5 = arith.constant 0 : index
    %c0_6 = arith.constant 0 : index
    %7 = vector.load %arg10[%c0_5, %c0_6] : memref<2x128xf32, #tpu.memory_space<vmem>>, vector<2x128xf32>
    tpu.vector_store %arg10[%c0_5, %c0_6], %6 {strides = array<i32>} : memref<2x128xf32, #tpu.memory_space<vmem>>, vector<2x128xf32>,
    %c1_i32 = arith.constant 1 : i32
    %8 = arith.cmpi eq, %arg1, %c1_i32 : i32
    %9 = arith.extui %8 : i1 to i32
    %c0_i32_7 = arith.constant 0 : i32
    %10 = arith.cmpi ne, %9, %c0_i32_7 : i32
    scf.if %10 {
      %c0_8 = arith.constant 0 : index
      %c0_9 = arith.constant 0 : index
      %11 = vector.load %arg10[%c0_8, %c0_9] : memref<2x128xf32, #tpu.memory_space<vmem>>, vector<2x128xf32>
      %cst_10 = arith.constant 6.250000e-02 : f32
      %12 = vector.broadcast %cst_10 : f32 to vector<2x128xf32>
      %13 = arith.mulf %11, %12 : vector<2x128xf32>
      %cst_11 = arith.constant dense<0.000000e+00> : vector<2xf32>
      %14 = vector.multi_reduction <add>, %13, %cst_11 [1] : vector<2x128xf32> to vector<2xf32>
      %15 = vector.shape_cast %14 : vector<2xf32> to vector<2x1xf32>
      %cst_12 = arith.constant 1.280000e+02 : f32
      %16 = vector.broadcast %cst_12 : f32 to vector<2x1xf32>
      %17 = arith.divf %15, %16 : vector<2x1xf32>
      %18 = vector.broadcast %17 : vector<2x1xf32> to vector<2x128xf32>
      %19 = arith.subf %13, %18 : vector<2x128xf32>
      %20 = arith.mulf %19, %19 : vector<2x128xf32>
      %cst_13 = arith.constant dense<0.000000e+00> : vector<2xf32>
      %21 = vector.multi_reduction <add>, %20, %cst_13 [1] : vector<2x128xf32> to vector<2xf32>
      %22 = vector.shape_cast %21 : vector<2xf32> to vector<2x1xf32>
      %cst_14 = arith.constant 1.280000e+02 : f32
      %23 = vector.broadcast %cst_14 : f32 to vector<2x1xf32>
      %24 = arith.divf %22, %23 : vector<2x1xf32>
      %25 = vector.broadcast %17 : vector<2x1xf32> to vector<2x128xf32>
      %26 = arith.subf %13, %25 : vector<2x128xf32>
      %cst_15 = arith.constant 9.99999974E-6 : f32
      %27 = vector.broadcast %cst_15 : f32 to vector<2x1xf32>
      %28 = arith.addf %24, %27 : vector<2x1xf32>
      %29 = math.rsqrt %28 : vector<2x1xf32>
      %30 = vector.broadcast %29 : vector<2x1xf32> to vector<2x128xf32>
      %31 = arith.mulf %26, %30 : vector<2x128xf32>
      %c0_16 = arith.constant 0 : index
      %c0_17 = arith.constant 0 : index
      %32 = vector.load %arg3[%c0_16, %c0_17] : memref<1x128xf32, #tpu.memory_space<vmem>>, vector<1x128xf32>
      %33 = vector.broadcast %32 : vector<1x128xf32> to vector<2x128xf32>
      %34 = arith.mulf %31, %33 : vector<2x128xf32>
      %c0_18 = arith.constant 0 : index
      %c0_19 = arith.constant 0 : index
      %35 = vector.load %arg4[%c0_18, %c0_19] : memref<1x128xf32, #tpu.memory_space<vmem>>, vector<1x128xf32>
      %36 = vector.broadcast %35 : vector<1x128xf32> to vector<2x128xf32>
      %37 = arith.addf %34, %36 : vector<2x128xf32>
      %c0_20 = arith.constant 0 : index
      %c0_21 = arith.constant 0 : index
      %38 = vector.load %arg5[%c0_20, %c0_21] : memref<128x128xf32, #tpu.memory_space<vmem>>, vector<128x128xf32>
      %cst_22 = arith.constant dense<0.000000e+00> : vector<2x128xf32>
      %39 = tpu.matmul %37, %38, %cst_22 {dimension_numbers = #tpu.dot_dimension_numbers<[1], [0], [0], [1], [0, 0, 1, 1], [], []>, precision = #tpu.contract_precision<fp32>} : vector<2x128xf32>, vector<128x128xf32>, vector<2x128xf32> -> vector<2x128xf32>
      %c0_23 = arith.constant 0 : index
      %c0_24 = arith.constant 0 : index
      %40 = vector.load %arg6[%c0_23, %c0_24] : memref<1x128xf32, #tpu.memory_space<vmem>>, vector<1x128xf32>
      %41 = vector.broadcast %40 : vector<1x128xf32> to vector<2x128xf32>
      %42 = arith.addf %39, %41 : vector<2x128xf32>
      %cst_25 = arith.constant 0.000000e+00 : f32
      %43 = vector.broadcast %cst_25 : f32 to vector<2x128xf32>
      %44 = arith.maximumf %42, %43 : vector<2x128xf32>
      %c0_26 = arith.constant 0 : index
      %c0_27 = arith.constant 0 : index
      %45 = vector.load %arg7[%c0_26, %c0_27] : memref<128x128xf32, #tpu.memory_space<vmem>>, vector<128x128xf32>
      %cst_28 = arith.constant dense<0.000000e+00> : vector<2x128xf32>
      %46 = tpu.matmul %44, %45, %cst_28 {dimension_numbers = #tpu.dot_dimension_numbers<[1], [0], [0], [1], [0, 0, 1, 1], [], []>, precision = #tpu.contract_precision<fp32>} : vector<2x128xf32>, vector<128x128xf32>, vector<2x128xf32> -> vector<2x128xf32>
      %c0_29 = arith.constant 0 : index
      %c0_30 = arith.constant 0 : index
      %47 = vector.load %arg8[%c0_29, %c0_30] : memref<1x128xf32, #tpu.memory_space<vmem>>, vector<1x128xf32>
      %48 = vector.broadcast %47 : vector<1x128xf32> to vector<2x128xf32>
      %49 = arith.addf %46, %48 : vector<2x128xf32>
      %50 = math.tanh %49 : vector<2x128xf32>
      %51 = vector.shape_cast %50 : vector<2x128xf32> to vector<2x1x128xf32>
      %c0_31 = arith.constant 0 : index
      %c0_32 = arith.constant 0 : index
      %c0_33 = arith.constant 0 : index
      %52 = vector.load %arg9[%c0_31, %c0_32, %c0_33] : memref<2x1x128xf32, #tpu.memory_space<vmem>>, vector<2x1x128xf32>
      tpu.vector_store %arg9[%c0_31, %c0_32, %c0_33], %51 {strides = array<i32>} : memref<2x1x128xf32, #tpu.memory_space<vmem>>, vector<2x1x128xf32>,
    } else {
    }
    return
  }
  func.func @transform_0(%arg0: i32, %arg1: i32) -> (i32, i32, i32) {
    %c0_i32 = arith.constant 0 : i32
    %c0_i32_0 = arith.constant 0 : i32
    return %arg0, %arg1, %c0_i32 : i32, i32, i32
  }
  func.func @transform_1(%arg0: i32, %arg1: i32) -> (i32, i32) {
    %c0_i32 = arith.constant 0 : i32
    %c0_i32_0 = arith.constant 0 : i32
    %c0_i32_1 = arith.constant 0 : i32
    return %c0_i32, %c0_i32_0 : i32, i32
  }
  func.func @transform_2(%arg0: i32, %arg1: i32) -> (i32, i32) {
    %c0_i32 = arith.constant 0 : i32
    %c0_i32_0 = arith.constant 0 : i32
    %c0_i32_1 = arith.constant 0 : i32
    return %c0_i32, %c0_i32_0 : i32, i32
  }
  func.func @transform_3(%arg0: i32, %arg1: i32) -> (i32, i32) {
    %c0_i32 = arith.constant 0 : i32
    %c0_i32_0 = arith.constant 0 : i32
    %c0_i32_1 = arith.constant 0 : i32
    return %c0_i32, %c0_i32_0 : i32, i32
  }
  func.func @transform_4(%arg0: i32, %arg1: i32) -> (i32, i32) {
    %c0_i32 = arith.constant 0 : i32
    %c0_i32_0 = arith.constant 0 : i32
    %c0_i32_1 = arith.constant 0 : i32
    return %c0_i32, %c0_i32_0 : i32, i32
  }
  func.func @transform_5(%arg0: i32, %arg1: i32) -> (i32, i32) {
    %c0_i32 = arith.constant 0 : i32
    %c0_i32_0 = arith.constant 0 : i32
    %c0_i32_1 = arith.constant 0 : i32
    return %c0_i32, %c0_i32_0 : i32, i32
  }
  func.func @transform_6(%arg0: i32, %arg1: i32) -> (i32, i32) {
    %c0_i32 = arith.constant 0 : i32
    %c0_i32_0 = arith.constant 0 : i32
    %c0_i32_1 = arith.constant 0 : i32
    return %c0_i32, %c0_i32_0 : i32, i32
  }
  func.func @transform_7(%arg0: i32, %arg1: i32) -> (i32, i32, i32) {
    %c0_i32 = arith.constant 0 : i32
    %c0_i32_0 = arith.constant 0 : i32
    %c0_i32_1 = arith.constant 0 : i32
    return %arg0, %c0_i32, %c0_i32_0 : i32, i32, i32
  }
}

</mosaic_0001>

<llo_original>
// kernel: tpu_custom_call.1
$region0: #{tpu_custom_call.1}
  #allocation0 [shape = 'u32[]', space=smem, size = 0x4, offset = 0x4, fixed_abs, tag = 'smem constant byte address 0x4 - core index']
  #allocation1 [shape = 'u32[144,128]{1,0:T(1,128)}', space=vmem, size = 0x12000, scoped, tag = 'internal scratch']
  #allocation2 [shape = 'f32[2,128]{1,0:T(2,128)}', space=vmem, size = 0x400, scoped, tag = 'scratch operand']
  %s0 = inlined_call_operand.hbm [shape: f32[2,16,128], index: 0, kind: input, shape index: {}]
  %s1 = inlined_call_operand.vmem [shape: f32[1,128], index: 1, kind: input, shape index: {}]
  %s2 = inlined_call_operand.vmem [shape: f32[1,128], index: 2, kind: input, shape index: {}]
  %s3 = inlined_call_operand.hbm [shape: f32[128,128], index: 3, kind: input, shape index: {}]
  %s4 = inlined_call_operand.vmem [shape: f32[1,128], index: 4, kind: input, shape index: {}]
  %s5 = inlined_call_operand.hbm [shape: f32[128,128], index: 5, kind: input, shape index: {}]
  %s6 = inlined_call_operand.vmem [shape: f32[1,128], index: 6, kind: input, shape index: {}]
  %s7 = inlined_call_operand.hbm [shape: f32[2,1,128], index: 7, kind: output, shape index: {}]
  %s8 = sld [smem:[#allocation0]]
  $region81: #{tpu_custom_call.1} parent=0
    _
  %s10 = ssub.s32 1, %s8
  %s11 = scalar_select 0, %s10, %s8
  $region1: #{tpu_custom_call.1} parent=0
    #allocation3 [shape = 'u8[16384]{0}', space=vmem, size = 0x4000, scoped, tag = 'input window, operand 0']
    #allocation4 [shape = 's32[2]{0}', space=sflag, size = 0x8, scoped, tag = 'scoped memory for tpu_custom_call.1']
    #allocation5 [shape = 's32[2]{0}', space=sflag, size = 0x8, scoped, tag = 'scoped memory for tpu_custom_call.1']
    #allocation6 [shape = 'u8[65536]{0}', space=vmem, size = 0x10000, scoped, tag = 'input window, operand 3, single buffered']
    #allocation7 [shape = 's32[1]{0}', space=sflag, size = 0x4, scoped, tag = 'scoped memory for tpu_custom_call.1']
    #allocation8 [shape = 'u8[65536]{0}', space=vmem, size = 0x10000, scoped, tag = 'input window, operand 5, single buffered']
    #allocation9 [shape = 'u8[1024]{0}', space=vmem, size = 0x400, scoped, tag = 'output window, operand 0, single buffered']
    %12 = vsyncpa [#allocation4], 0
    %s13 = scalar_lea.sflag [#allocation4], 1
    %14 = vsyncpa %s13, 0
    %15 = vsyncpa [#allocation7], 0
    %16 = vsyncpa [#allocation5], 0
    loop: start=0, step=1, limit=4
    $region2: #{tpu_custom_call.1} parent=1 // loop_pre_header
      _
    $region3: #{tpu_custom_call.1} parent=1 // loop_header
      %s18 = sphi 0, %s22
      %p19 = scmp.ge.s32.totalorder %s18, 4
      %s25 = sphi 0, %s37
      %s26 = sphi 0, %s33
      %s27 = sphi 0, %s25
      %s28 = sphi 0, %s26
      %s29 = sphi 0, %s27
      %s30 = sphi 0, %s28
      %s42 = sphi 0, %s44
      %s45 = sphi 0, %s42
      %s46 = sphi 0, %s45
      %s62 = sphi 0, %s46
      %s66 = sphi 0, %s66
      %s68 = sphi 0, %s66
      %s69 = sphi 0, %s68
      %s83 = sphi 0, %s69
      %s87 = sphi 0, %s87
      %s89 = sphi 0, %s87
      %s90 = sphi 0, %s89
      %s104 = sphi 0, %s90
      %s108 = sphi 0, %s108
      %s110 = sphi 0, %s108
      %s111 = sphi 0, %s110
      %s125 = sphi 0, %s111
      %s129 = sphi 0, %s129
      %s131 = sphi 0, %s129
      %s132 = sphi 0, %s131
      %s146 = sphi 0, %s132
      %s150 = sphi 0, %s150
      %s152 = sphi 0, %s150
      %s153 = sphi 0, %s152
      %s167 = sphi 0, %s153
      %s171 = sphi 0, %s171
      %s173 = sphi 0, %s171
      %s174 = sphi 0, %s173
      %s188 = sphi 0, %s174
      %s194 = sphi 0, %s196
      %s197 = sphi 0, %s194
      %s198 = sphi 0, %s197
      %s214 = sphi 0, %s198
    $region4: #{tpu_custom_call.1} parent=1 // loop_header_branch
      %21 = sbr.rel (%p19) target = $region8
    $region5: #{tpu_custom_call.1} parent=1 // loop_body
      %s23 = ssub.s32 %s18, 1
      %s24 = ssub.s32 %s18, 2
      %s31 = sadd.s32 1, %s26
      %p32 = scmp.ge.s32.totalorder %s31, 2
      %s33 = scalar_select %p32, 0, %s31
      %s34 = sadd.s32 1, %s25
      %s35 = scalar_select %p32, %s34, %s25
      %p36 = scmp.ge.s32.totalorder %s35, 1
      %s37 = scalar_select %p36, 0, %s35
      %s38 = ssub.s32 %s25, %s37
      %s39 = ssub.s32 %s26, %s33
      %s40 = sor.u32 %s38, %s39
      %p41 = scmp.eq.s32.totalorder %s40, 0
      %s43 = sadd.s32 %s42, 1
      %s44 = scalar_select %p41, %s42, %s43
      %p47 = pneg %p41
      %p48 = scmp.eq.s32.totalorder %s18, 1
      %p49 = por %p47, %p48
      %p50 = scmp.ne.s32.totalorder %s42, %s45
      %p51 = scmp.eq.s32.totalorder %s18, 0
      %p52 = por %p50, %p51
      %p53 = scmp.ne.s32.totalorder %s42, %s45
      %p54 = scmp.eq.s32.totalorder %s23, 1
      %p55 = por %p53, %p54
      %p56 = scmp.ne.s32.totalorder %s45, %s46
      %p57 = scmp.eq.s32.totalorder %s23, 0
      %p58 = por %p56, %p57
      %p59 = scmp.ne.s32.totalorder %s45, %s46
      %p60 = scmp.eq.s32.totalorder %s24, 1
      %p61 = por %p59, %p60
      %p63 = scmp.ne.s32.totalorder %s46, %s62
      %p64 = scmp.eq.s32.totalorder %s24, 0
      %p65 = por %p63, %p64
      %s67 = sadd.s32 %s66, 1
      %p70 = scmp.eq.s32.totalorder %s18, 1
      %p71 = scmp.ne.s32.totalorder %s66, %s68
      %p72 = scmp.eq.s32.totalorder %s18, 0
      %p73 = por %p71, %p72
      %p74 = scmp.ne.s32.totalorder %s66, %s68
      %p75 = scmp.eq.s32.totalorder %s23, 1
      %p76 = por %p74, %p75
      %p77 = scmp.ne.s32.totalorder %s68, %s69
      %p78 = scmp.eq.s32.totalorder %s23, 0
      %p79 = por %p77, %p78
      %p80 = scmp.ne.s32.totalorder %s68, %s69
      %p81 = scmp.eq.s32.totalorder %s24, 1
      %p82 = por %p80, %p81
      %p84 = scmp.ne.s32.totalorder %s69, %s83
      %p85 = scmp.eq.s32.totalorder %s24, 0
      %p86 = por %p84, %p85
      %s88 = sadd.s32 %s87, 1
      %p91 = scmp.eq.s32.totalorder %s18, 1
      %p92 = scmp.ne.s32.totalorder %s87, %s89
      %p93 = scmp.eq.s32.totalorder %s18, 0
      %p94 = por %p92, %p93
      %p95 = scmp.ne.s32.totalorder %s87, %s89
      %p96 = scmp.eq.s32.totalorder %s23, 1
      %p97 = por %p95, %p96
      %p98 = scmp.ne.s32.totalorder %s89, %s90
      %p99 = scmp.eq.s32.totalorder %s23, 0
      %p100 = por %p98, %p99
      %p101 = scmp.ne.s32.totalorder %s89, %s90
      %p102 = scmp.eq.s32.totalorder %s24, 1
      %p103 = por %p101, %p102
      %p105 = scmp.ne.s32.totalorder %s90, %s104
      %p106 = scmp.eq.s32.totalorder %s24, 0
      %p107 = por %p105, %p106
      %s109 = sadd.s32 %s108, 1
      %p112 = scmp.eq.s32.totalorder %s18, 1
      %p113 = scmp.ne.s32.totalorder %s108, %s110
      %p114 = scmp.eq.s32.totalorder %s18, 0
      %p115 = por %p113, %p114
      %p116 = scmp.ne.s32.totalorder %s108, %s110
      %p117 = scmp.eq.s32.totalorder %s23, 1
      %p118 = por %p116, %p117
      %p119 = scmp.ne.s32.totalorder %s110, %s111
      %p120 = scmp.eq.s32.totalorder %s23, 0
      %p121 = por %p119, %p120
      %p122 = scmp.ne.s32.totalorder %s110, %s111
      %p123 = scmp.eq.s32.totalorder %s24, 1
      %p124 = por %p122, %p123
      %p126 = scmp.ne.s32.totalorder %s111, %s125
      %p127 = scmp.eq.s32.totalorder %s24, 0
      %p128 = por %p126, %p127
      %s130 = sadd.s32 %s129, 1
      %p133 = scmp.eq.s32.totalorder %s18, 1
      %p134 = scmp.ne.s32.totalorder %s129, %s131
      %p135 = scmp.eq.s32.totalorder %s18, 0
      %p136 = por %p134, %p135
      %p137 = scmp.ne.s32.totalorder %s129, %s131
      %p138 = scmp.eq.s32.totalorder %s23, 1
      %p139 = por %p137, %p138
      %p140 = scmp.ne.s32.totalorder %s131, %s132
      %p141 = scmp.eq.s32.totalorder %s23, 0
      %p142 = por %p140, %p141
      %p143 = scmp.ne.s32.totalorder %s131, %s132
      %p144 = scmp.eq.s32.totalorder %s24, 1
      %p145 = por %p143, %p144
      %p147 = scmp.ne.s32.totalorder %s132, %s146
      %p148 = scmp.eq.s32.totalorder %s24, 0
      %p149 = por %p147, %p148
      %s151 = sadd.s32 %s150, 1
      %p154 = scmp.eq.s32.totalorder %s18, 1
      %p155 = scmp.ne.s32.totalorder %s150, %s152
      %p156 = scmp.eq.s32.totalorder %s18, 0
      %p157 = por %p155, %p156
      %p158 = scmp.ne.s32.totalorder %s150, %s152
      %p159 = scmp.eq.s32.totalorder %s23, 1
      %p160 = por %p158, %p159
      %p161 = scmp.ne.s32.totalorder %s152, %s153
      %p162 = scmp.eq.s32.totalorder %s23, 0
      %p163 = por %p161, %p162
      %p164 = scmp.ne.s32.totalorder %s152, %s153
      %p165 = scmp.eq.s32.totalorder %s24, 1
      %p166 = por %p164, %p165
      %p168 = scmp.ne.s32.totalorder %s153, %s167
      %p169 = scmp.eq.s32.totalorder %s24, 0
      %p170 = por %p168, %p169
      %s172 = sadd.s32 %s171, 1
      %p175 = scmp.eq.s32.totalorder %s18, 1
      %p176 = scmp.ne.s32.totalorder %s171, %s173
      %p177 = scmp.eq.s32.totalorder %s18, 0
      %p178 = por %p176, %p177
      %p179 = scmp.ne.s32.totalorder %s171, %s173
      %p180 = scmp.eq.s32.totalorder %s23, 1
      %p181 = por %p179, %p180
      %p182 = scmp.ne.s32.totalorder %s173, %s174
      %p183 = scmp.eq.s32.totalorder %s23, 0
      %p184 = por %p182, %p183
      %p185 = scmp.ne.s32.totalorder %s173, %s174
      %p186 = scmp.eq.s32.totalorder %s24, 1
      %p187 = por %p185, %p186
      %p189 = scmp.ne.s32.totalorder %s174, %s188
      %p190 = scmp.eq.s32.totalorder %s24, 0
      %p191 = por %p189, %p190
      %s192 = ssub.s32 %s25, %s37
      %p193 = scmp.eq.s32.totalorder %s192, 0
      %s195 = sadd.s32 %s194, 1
      %s196 = scalar_select %p193, %s194, %s195
      %p199 = pneg %p193
      %p200 = scmp.eq.s32.totalorder %s18, 1
      %p201 = por %p199, %p200
      %p202 = scmp.ne.s32.totalorder %s194, %s197
      %p203 = scmp.eq.s32.totalorder %s18, 0
      %p204 = por %p202, %p203
      %p205 = scmp.ne.s32.totalorder %s194, %s197
      %p206 = scmp.eq.s32.totalorder %s23, 1
      %p207 = por %p205, %p206
      %p208 = scmp.ne.s32.totalorder %s197, %s198
      %p209 = scmp.eq.s32.totalorder %s23, 0
      %p210 = por %p208, %p209
      %p211 = scmp.ne.s32.totalorder %s197, %s198
      %p212 = scmp.eq.s32.totalorder %s24, 1
      %p213 = por %p211, %p212
      %p215 = scmp.ne.s32.totalorder %s198, %s214
      %p216 = scmp.eq.s32.totalorder %s24, 0
      %p217 = por %p215, %p216
      %p218 = scmp.le.s32.totalorder 1, %s18
      %p219 = scmp.lt.s32.totalorder %s18, 3
      %p220 = pnand %p218, %p219
      %p221 = pneg %p220
      // Predicated region
      $region9: #{tpu_custom_call.1} parent=5 // pred_check
        _
      $region10: #{tpu_custom_call.1} parent=5 // pred_check_branch
        %223 = sbr.rel (%p220) target = $region12
      $region11: #{tpu_custom_call.1} parent=5 // pred_region
        %s224 = ssub.s32 %s18, 1
        // Predicated region
        $region13: #{tpu_custom_call.1} parent=11 // pred_check
          %p225 = pneg %p79
        $region14: #{tpu_custom_call.1} parent=11 // pred_check_branch
          %227 = sbr.rel (%p225) target = $region16
        $region15: #{tpu_custom_call.1} parent=11 // pred_region
          _
        $region16: #{tpu_custom_call.1} parent=11 // pred_fallthru
          _
        // Predicated region
        $region17: #{tpu_custom_call.1} parent=11 // pred_check
          %p228 = pneg %p100
        $region18: #{tpu_custom_call.1} parent=11 // pred_check_branch
          %230 = sbr.rel (%p228) target = $region20
        $region19: #{tpu_custom_call.1} parent=11 // pred_region
          _
        $region20: #{tpu_custom_call.1} parent=11 // pred_fallthru
          _
        // Predicated region
        $region21: #{tpu_custom_call.1} parent=11 // pred_check
          %p231 = pneg %p121
        $region22: #{tpu_custom_call.1} parent=11 // pred_check_branch
          %233 = sbr.rel (%p231) target = $region24
        $region23: #{tpu_custom_call.1} parent=11 // pred_region
          %s235 = ssub.s32 2048, 2048
          %236 = vsyncadd [#allocation7], %s235
          %s237 = sshll.u32 [#allocation6], 4
          %s238 = int_to_ptr.vmem [resolvable:$true] %s237
          %243 = dma.hbm_to_vmem [thread:$0]  %s3, 2048, %s238, [#allocation7], 128, 128, 8
        $region24: #{tpu_custom_call.1} parent=11 // pred_fallthru
          _
        // Predicated region
        $region25: #{tpu_custom_call.1} parent=11 // pred_check
          %p244 = pneg %p142
        $region26: #{tpu_custom_call.1} parent=11 // pred_check_branch
          %246 = sbr.rel (%p244) target = $region28
        $region27: #{tpu_custom_call.1} parent=11 // pred_region
          _
        $region28: #{tpu_custom_call.1} parent=11 // pred_fallthru
          _
        // Predicated region
        $region29: #{tpu_custom_call.1} parent=11 // pred_check
          %p247 = pneg %p163
        $region30: #{tpu_custom_call.1} parent=11 // pred_check_branch
          %249 = sbr.rel (%p247) target = $region32
        $region31: #{tpu_custom_call.1} parent=11 // pred_region
          %s251 = ssub.s32 2048, 2048
          %252 = vsyncadd [#allocation7], %s251
          %s253 = sshll.u32 [#allocation8], 4
          %s254 = int_to_ptr.vmem [resolvable:$true] %s253
          %259 = dma.hbm_to_vmem [thread:$0]  %s5, 2048, %s254, [#allocation7], 128, 128, 8
        $region32: #{tpu_custom_call.1} parent=11 // pred_fallthru
          _
        // Predicated region
        $region33: #{tpu_custom_call.1} parent=11 // pred_check
          %p260 = pneg %p184
        $region34: #{tpu_custom_call.1} parent=11 // pred_check_branch
          %262 = sbr.rel (%p260) target = $region36
        $region35: #{tpu_custom_call.1} parent=11 // pred_region
          _
        $region36: #{tpu_custom_call.1} parent=11 // pred_fallthru
          _
      $region12: #{tpu_custom_call.1} parent=5 // pred_fallthru
        _
      %p263 = scmp.lt.s32.totalorder %s18, 2
      // Predicated region
      $region37: #{tpu_custom_call.1} parent=5 // pred_check
        %p264 = pneg %p263
      $region38: #{tpu_custom_call.1} parent=5 // pred_check_branch
        %266 = sbr.rel (%p264) target = $region40
      $region39: #{tpu_custom_call.1} parent=5 // pred_region
        // Predicated region
        $region41: #{tpu_custom_call.1} parent=39 // pred_check
          %p267 = pneg %p52
        $region42: #{tpu_custom_call.1} parent=39 // pred_check_branch
          %269 = sbr.rel (%p267) target = $region44
        $region43: #{tpu_custom_call.1} parent=39 // pred_region
          %s270 = sand.u32 %s42, 1
          %s271 = scalar_lea.sflag [#allocation4], %s270
          %s272 = sand.u32 %s42, 1
          %s273 = smul.addr %s272, 16
          %s274 = scalar_lea.vmem [#allocation3], %s273
          %s275 = smul.u32 2, %s25
          %s277 = ssub.s32 256, 256
          %278 = vsyncadd %s271, %s277
          %s279 = smul.addr %s275, 2
          %s280 = sadd.s32 %s26, %s279
          %s281 = smul.addr %s280, 128
          %s282 = scalar_lea.hbm %s0, %s281
          %s283 = sshll.u32 %s274, 4
          %s284 = int_to_ptr.vmem [resolvable:$true] %s283
          %289 = dma.hbm_to_vmem [thread:$0]  %s282, 256, %s284, %s271, 256, 128, 8
        $region44: #{tpu_custom_call.1} parent=39 // pred_fallthru
          _
      $region40: #{tpu_custom_call.1} parent=5 // pred_fallthru
        _
      %p290 = scmp.le.s32.totalorder 1, %s18
      %p291 = scmp.lt.s32.totalorder %s18, 3
      %p292 = pnand %p290, %p291
      %p293 = pneg %p292
      // Predicated region
      $region45: #{tpu_custom_call.1} parent=5 // pred_check
        _
      $region46: #{tpu_custom_call.1} parent=5 // pred_check_branch
        %295 = sbr.rel (%p292) target = $region48
      $region47: #{tpu_custom_call.1} parent=5 // pred_region
        %s296 = ssub.s32 %s18, 1
        %s297 = sand.u32 %s45, 1
        %s298 = scalar_lea.sflag [#allocation4], %s297
        %s299 = sand.u32 %s45, 1
        %s300 = smul.addr %s299, 16
        %s301 = scalar_lea.vmem [#allocation3], %s300
        // Predicated region
        $region49: #{tpu_custom_call.1} parent=47 // pred_check
          %p302 = pneg %p58
        $region50: #{tpu_custom_call.1} parent=47 // pred_check_branch
          %304 = sbr.rel (%p302) target = $region52
        $region51: #{tpu_custom_call.1} parent=47 // pred_region
          %305 = dma.done %s298, 256
        $region52: #{tpu_custom_call.1} parent=47 // pred_fallthru
          _
        // Predicated region
        $region53: #{tpu_custom_call.1} parent=47 // pred_check
          %p306 = pneg %p121
        $region54: #{tpu_custom_call.1} parent=47 // pred_check_branch
          %308 = sbr.rel (%p306) target = $region56
        $region55: #{tpu_custom_call.1} parent=47 // pred_region
          %309 = dma.done [#allocation7], 2048
        $region56: #{tpu_custom_call.1} parent=47 // pred_fallthru
          _
        // Predicated region
        $region57: #{tpu_custom_call.1} parent=47 // pred_check
          %p310 = pneg %p163
        $region58: #{tpu_custom_call.1} parent=47 // pred_check_branch
          %312 = sbr.rel (%p310) target = $region60
        $region59: #{tpu_custom_call.1} parent=47 // pred_region
          %313 = dma.done [#allocation7], 2048
        $region60: #{tpu_custom_call.1} parent=47 // pred_fallthru
          _
        %s314 = sand.u32 %s45, 1
        %s315 = scalar_lea.sflag [#allocation4], %s314
        %s316 = sand.u32 %s45, 1
        %s317 = smul.addr %s316, 16
        %s318 = scalar_lea.vmem [#allocation3], %s317
        %p319 = pneg %p58
        %p320 = pneg %p55
        %p321 = pneg %p79
        %p322 = pneg %p76
        %p323 = pneg %p100
        %p324 = pneg %p97
        %p325 = pneg %p121
        %p326 = pneg %p118
        %p327 = pneg %p142
        %p328 = pneg %p139
        %p329 = pneg %p163
        %p330 = pneg %p160
        %p331 = pneg %p184
        %p332 = pneg %p181
        %p333 = pneg %p210
        %p334 = pneg %p207
        %s335 = smul.u32 2, %s27
        %s336 = smul.u32 2, %s27
        %p337 = scmp.eq.s32.totalorder %s28, 0
        // Predicated region
        $region61: #{tpu_custom_call.1} parent=47 // pred_check
          %p338 = pneg %p337
        $region62: #{tpu_custom_call.1} parent=47 // pred_check_branch
          %340 = sbr.rel (%p338) target = $region64
        $region63: #{tpu_custom_call.1} parent=47 // pred_region
          %341 = vst [vmem:[#allocation2] sm:$0x3] 0.0
        $region64: #{tpu_custom_call.1} parent=47 // pred_fallthru
          _
        %v342 = vld [vmem:[#allocation2] sm:$0x3]
        %v343 = vld [vmem:[%s301] sm:$0xff]
        %v344 = vld [vmem:[%s301 + $0x8] sm:$0xff]
        %v345 = vrot.slane %v343, 4
        %v346 = vadd.f32 %v343, %v345
        %v347 = vrot.slane %v346, 2
        %v348 = vadd.f32 %v346, %v347
        %v349 = vrot.slane %v348, 1
        %v350 = vadd.f32 %v348, %v349
        %v351 = vrot.slane %v344, 4
        %v352 = vadd.f32 %v344, %v351
        %v353 = vrot.slane %v352, 2
        %v354 = vadd.f32 %v352, %v353
        %v355 = vrot.slane %v354, 1
        %v356 = vadd.f32 %v354, %v355
        %vm359 = vcmask 1041409
        %v360 = vsel %vm359, %v356, %v350
        %v362 = vadd.f32 %v342, %v360
        %363 = vst [vmem:[#allocation2] sm:$0x3] %v362
        %p364 = scmp.eq.s32.totalorder %s28, 1
        // Predicated region
        $region65: #{tpu_custom_call.1} parent=47 // pred_check
          %p365 = pneg %p364
        $region66: #{tpu_custom_call.1} parent=47 // pred_check_branch
          %367 = sbr.rel (%p365) target = $region68
        $region67: #{tpu_custom_call.1} parent=47 // pred_region
          %v368 = vld [vmem:[#allocation2] sm:$0x3]
          %v369 = vmul.f32 %v368, 0.0625
          %vm370 = vcmask 1041408
          %v371 = vsel %vm370, %v369, 0.0
          %372 = vadd.xlane.f32.xlu0 %v371
          %v373 = vpop.xlane.xlu0 %372
          %v374 = vrcp.pop 128.0
          %v375 = vmul.f32 %v373, %v374
          %v376 = vsub.f32 %v369, %v375
          %v377 = vmul.f32 %v376, %v376
          %v378 = vsel %vm370, %v377, 0.0
          %379 = vadd.xlane.f32.xlu0 %v378
          %v380 = vpop.xlane.xlu0 %379
          %v381 = vmul.f32 %v380, %v374
          %v382 = vadd.f32 %v381, 1e-05
          %v383 = vrsqrt.pop %v382
          %v384 = vmul.f32 %v376, %v383
          %v385 = vld [vmem:[%s1] sm:$0x1]
          %v387 = vlaneseq
          %v388 = vshrl.u32 %v387, 7
          %v389 = vsub.s32 0, %v388
          %v390 = vrot.slane %v385, %v389
          %v392 = vmul.f32 %v384, %v390
          %v393 = vld [vmem:[%s2] sm:$0x1]
          %v395 = vlaneseq
          %v396 = vshrl.u32 %v395, 7
          %v397 = vsub.s32 0, %v396
          %v398 = vrot.slane %v393, %v397
          %v400 = vadd.f32 %v392, %v398
          %v401 = vld [vmem:[#allocation6] sm:$0xff]
          %v402 = vld [vmem:[#allocation6 + $0x8] sm:$0xff]
          %v403 = vld [vmem:[#allocation6 + $0x10] sm:$0xff]
          %v404 = vld [vmem:[#allocation6 + $0x18] sm:$0xff]
          %v405 = vld [vmem:[#allocation6 + $0x20] sm:$0xff]
          %v406 = vld [vmem:[#allocation6 + $0x28] sm:$0xff]
          %v407 = vld [vmem:[#allocation6 + $0x30] sm:$0xff]
          %v408 = vld [vmem:[#allocation6 + $0x38] sm:$0xff]
          %v409 = vld [vmem:[#allocation6 + $0x40] sm:$0xff]
          %v410 = vld [vmem:[#allocation6 + $0x48] sm:$0xff]
          %v411 = vld [vmem:[#allocation6 + $0x50] sm:$0xff]
          %v412 = vld [vmem:[#allocation6 + $0x58] sm:$0xff]
          %v413 = vld [vmem:[#allocation6 + $0x60] sm:$0xff]
          %v414 = vld [vmem:[#allocation6 + $0x68] sm:$0xff]
          %v415 = vld [vmem:[#allocation6 + $0x70] sm:$0xff]
          %v416 = vld [vmem:[#allocation6 + $0x78] sm:$0xff]
          %v417 = vld [vmem:[%s4] sm:$0x1]
          %v419 = vlaneseq
          %v420 = vshrl.u32 %v419, 7
          %v421 = vsub.s32 0, %v420
          %v422 = vrot.slane %v417, %v421
          %424 = vmatprep.subr.mxu0 0.0
          %v425 = vand.u32 %v401, 4294901760
          %426 = vmatpush1.msra.mxu0 %v425
          %427 = vmatprep.subr.mxu0 0.0
          %v428 = vand.u32 %v402, 4294901760
          %429 = vmatpush1.msra.mxu0 %v428
          %430 = vmatprep.subr.mxu0 0.0
          %v431 = vand.u32 %v403, 4294901760
          %432 = vmatpush1.msra.mxu0 %v431
          %433 = vmatprep.subr.mxu0 0.0
          %v434 = vand.u32 %v404, 4294901760
          %435 = vmatpush1.msra.mxu0 %v434
          %436 = vmatprep.subr.mxu0 0.0
          %v437 = vand.u32 %v405, 4294901760
          %438 = vmatpush1.msra.mxu0 %v437
          %439 = vmatprep.subr.mxu0 0.0
          %v440 = vand.u32 %v406, 4294901760
          %441 = vmatpush1.msra.mxu0 %v440
          %442 = vmatprep.subr.mxu0 0.0
          %v443 = vand.u32 %v407, 4294901760
          %444 = vmatpush1.msra.mxu0 %v443
          %445 = vmatprep.subr.mxu0 0.0
          %v446 = vand.u32 %v408, 4294901760
          %447 = vmatpush1.msra.mxu0 %v446
          %448 = vmatprep.subr.mxu0 0.0
          %v449 = vand.u32 %v409, 4294901760
          %450 = vmatpush1.msra.mxu0 %v449
          %451 = vmatprep.subr.mxu0 0.0
          %v452 = vand.u32 %v410, 4294901760
          %453 = vmatpush1.msra.mxu0 %v452
          %454 = vmatprep.subr.mxu0 0.0
          %v455 = vand.u32 %v411, 4294901760
          %456 = vmatpush1.msra.mxu0 %v455
          %457 = vmatprep.subr.mxu0 0.0
          %v458 = vand.u32 %v412, 4294901760
          %459 = vmatpush1.msra.mxu0 %v458
          %460 = vmatprep.subr.mxu0 0.0
          %v461 = vand.u32 %v413, 4294901760
          %462 = vmatpush1.msra.mxu0 %v461
          %463 = vmatprep.subr.mxu0 0.0
          %v464 = vand.u32 %v414, 4294901760
          %465 = vmatpush1.msra.mxu0 %v464
          %466 = vmatprep.subr.mxu0 0.0
          %v467 = vand.u32 %v415, 4294901760
          %468 = vmatpush1.msra.mxu0 %v467
          %469 = vmatprep.subr.mxu0 0.0
          %v470 = vand.u32 %v416, 4294901760
          %471 = vmatpush1.msra.mxu0 %v470
          %472 = vmatprep.subr.mxu0 0.0
          %473 = vmatpush1.msra.mxu0 0.0
          %474 = vmatprep.subr.mxu0 0.0
          %475 = vmatpush1.msra.mxu0 0.0
          %476 = vmatprep.subr.mxu0 0.0
          %477 = vmatpush1.msra.mxu0 0.0
          %478 = vmatprep.subr.mxu0 0.0
          %479 = vmatpush1.msra.mxu0 0.0
          %480 = vmatprep.subr.mxu0 0.0
          %481 = vmatpush1.msra.mxu0 0.0
          %482 = vmatprep.subr.mxu0 0.0
          %483 = vmatpush1.msra.mxu0 0.0
          %484 = vmatprep.subr.mxu0 0.0
          %485 = vmatpush1.msra.mxu0 0.0
          %486 = vmatprep.subr.mxu0 0.0
          %487 = vmatpush1.msra.mxu0 0.0
          %488 = vmatprep.subr.mxu0 0.0
          %489 = vmatpush1.msra.mxu0 0.0
          %490 = vmatprep.subr.mxu0 0.0
          %491 = vmatpush1.msra.mxu0 0.0
          %492 = vmatprep.subr.mxu0 0.0
          %493 = vmatpush1.msra.mxu0 0.0
          %494 = vmatprep.subr.mxu0 0.0
          %495 = vmatpush1.msra.mxu0 0.0
          %496 = vmatprep.subr.mxu0 0.0
          %497 = vmatpush1.msra.mxu0 0.0
          %498 = vmatprep.subr.mxu0 0.0
          %499 = vmatpush1.msra.mxu0 0.0
          %500 = vmatprep.subr.mxu0 0.0
          %501 = vmatpush1.msra.mxu0 0.0
          %502 = vmatprep.subr.mxu0 0.0
          %503 = vmatpush1.msra.mxu0 0.0
          %504 = vmatprep.mubr.f32.mxu0 0.0
          %v505 = vand.u32 %v400, 4294901760
          %v506 = vsub.f32 %v400, %v505
          %v507 = vand.u32 %v506, 4294901760
          %v508 = vsub.f32 %v506, %v507
          %v509 = vand.u32 %v508, 4294901760
          %510 = vmatmul.mubr.f32.gmra.mrb[0].mxu0 %v509
          %v511 = vpop.f32.mrb[0].mxu0
          %v512 = vadd.f32 %v422, %v511
          %v513 = vpop.f32.mrb[0].mxu0
          %514 = vdwg.mxu0
          %515 = vmatprep.subr.mxu0 0.0
          %v516 = vand.u32 %v401, 4294901760
          %v517 = vsub.f32 %v401, %v516
          %v518 = vand.u32 %v517, 4294901760
          %v519 = vsub.f32 %v517, %v518
          %v520 = vand.u32 %v519, 4294901760
          %521 = vmatpush1.msra.mxu0 %v520
          %522 = vmatprep.subr.mxu0 0.0
          %v523 = vand.u32 %v402, 4294901760
          %v524 = vsub.f32 %v402, %v523
          %v525 = vand.u32 %v524, 4294901760
          %v526 = vsub.f32 %v524, %v525
          %v527 = vand.u32 %v526, 4294901760
          %528 = vmatpush1.msra.mxu0 %v527
          %529 = vmatprep.subr.mxu0 0.0
          %v530 = vand.u32 %v403, 4294901760
          %v531 = vsub.f32 %v403, %v530
          %v532 = vand.u32 %v531, 4294901760
          %v533 = vsub.f32 %v531, %v532
          %v534 = vand.u32 %v533, 4294901760
          %535 = vmatpush1.msra.mxu0 %v534
          %536 = vmatprep.subr.mxu0 0.0
          %v537 = vand.u32 %v404, 4294901760
          %v538 = vsub.f32 %v404, %v537
          %v539 = vand.u32 %v538, 4294901760
          %v540 = vsub.f32 %v538, %v539
          %v541 = vand.u32 %v540, 4294901760
          %542 = vmatpush1.msra.mxu0 %v541
          %543 = vmatprep.subr.mxu0 0.0
          %v544 = vand.u32 %v405, 4294901760
          %v545 = vsub.f32 %v405, %v544
          %v546 = vand.u32 %v545, 4294901760
          %v547 = vsub.f32 %v545, %v546
          %v548 = vand.u32 %v547, 4294901760
          %549 = vmatpush1.msra.mxu0 %v548
          %550 = vmatprep.subr.mxu0 0.0
          %v551 = vand.u32 %v406, 4294901760
          %v552 = vsub.f32 %v406, %v551
          %v553 = vand.u32 %v552, 4294901760
          %v554 = vsub.f32 %v552, %v553
          %v555 = vand.u32 %v554, 4294901760
          %556 = vmatpush1.msra.mxu0 %v555
          %557 = vmatprep.subr.mxu0 0.0
          %v558 = vand.u32 %v407, 4294901760
          %v559 = vsub.f32 %v407, %v558
          %v560 = vand.u32 %v559, 4294901760
          %v561 = vsub.f32 %v559, %v560
          %v562 = vand.u32 %v561, 4294901760
          %563 = vmatpush1.msra.mxu0 %v562
          %564 = vmatprep.subr.mxu0 0.0
          %v565 = vand.u32 %v408, 4294901760
          %v566 = vsub.f32 %v408, %v565
          %v567 = vand.u32 %v566, 4294901760
          %v568 = vsub.f32 %v566, %v567
          %v569 = vand.u32 %v568, 4294901760
          %570 = vmatpush1.msra.mxu0 %v569
          %571 = vmatprep.subr.mxu0 0.0
          %v572 = vand.u32 %v409, 4294901760
          %v573 = vsub.f32 %v409, %v572
          %v574 = vand.u32 %v573, 4294901760
          %v575 = vsub.f32 %v573, %v574
          %v576 = vand.u32 %v575, 4294901760
          %577 = vmatpush1.msra.mxu0 %v576
          %578 = vmatprep.subr.mxu0 0.0
          %v579 = vand.u32 %v410, 4294901760
          %v580 = vsub.f32 %v410, %v579
          %v581 = vand.u32 %v580, 4294901760
          %v582 = vsub.f32 %v580, %v581
          %v583 = vand.u32 %v582, 4294901760
          %584 = vmatpush1.msra.mxu0 %v583
          %585 = vmatprep.subr.mxu0 0.0
          %v586 = vand.u32 %v411, 4294901760
          %v587 = vsub.f32 %v411, %v586
          %v588 = vand.u32 %v587, 4294901760
          %v589 = vsub.f32 %v587, %v588
          %v590 = vand.u32 %v589, 4294901760
          %591 = vmatpush1.msra.mxu0 %v590
          %592 = vmatprep.subr.mxu0 0.0
          %v593 = vand.u32 %v412, 4294901760
          %v594 = vsub.f32 %v412, %v593
          %v595 = vand.u32 %v594, 4294901760
          %v596 = vsub.f32 %v594, %v595
          %v597 = vand.u32 %v596, 4294901760
          %598 = vmatpush1.msra.mxu0 %v597
          %599 = vmatprep.subr.mxu0 0.0
          %v600 = vand.u32 %v413, 4294901760
          %v601 = vsub.f32 %v413, %v600
          %v602 = vand.u32 %v601, 4294901760
          %v603 = vsub.f32 %v601, %v602
          %v604 = vand.u32 %v603, 4294901760
          %605 = vmatpush1.msra.mxu0 %v604
          %606 = vmatprep.subr.mxu0 0.0
          %v607 = vand.u32 %v414, 4294901760
          %v608 = vsub.f32 %v414, %v607
          %v609 = vand.u32 %v608, 4294901760
          %v610 = vsub.f32 %v608, %v609
          %v611 = vand.u32 %v610, 4294901760
          %612 = vmatpush1.msra.mxu0 %v611
          %613 = vmatprep.subr.mxu0 0.0
          %v614 = vand.u32 %v415, 4294901760
          %v615 = vsub.f32 %v415, %v614
          %v616 = vand.u32 %v615, 4294901760
          %v617 = vsub.f32 %v615, %v616
          %v618 = vand.u32 %v617, 4294901760
          %619 = vmatpush1.msra.mxu0 %v618
          %620 = vmatprep.subr.mxu0 0.0
          %v621 = vand.u32 %v416, 4294901760
          %v622 = vsub.f32 %v416, %v621
          %v623 = vand.u32 %v622, 4294901760
          %v624 = vsub.f32 %v622, %v623
          %v625 = vand.u32 %v624, 4294901760
          %626 = vmatpush1.msra.mxu0 %v625
          %627 = vmatprep.subr.mxu0 0.0
          %628 = vmatpush1.msra.mxu0 0.0
          %629 = vmatprep.subr.mxu0 0.0
          %630 = vmatpush1.msra.mxu0 0.0
          %631 = vmatprep.subr.mxu0 0.0
          %632 = vmatpush1.msra.mxu0 0.0
          %633 = vmatprep.subr.mxu0 0.0
          %634 = vmatpush1.msra.mxu0 0.0
          %635 = vmatprep.subr.mxu0 0.0
          %636 = vmatpush1.msra.mxu0 0.0
          %637 = vmatprep.subr.mxu0 0.0
          %638 = vmatpush1.msra.mxu0 0.0
          %639 = vmatprep.subr.mxu0 0.0
          %640 = vmatpush1.msra.mxu0 0.0
          %641 = vmatprep.subr.mxu0 0.0
          %642 = vmatpush1.msra.mxu0 0.0
          %643 = vmatprep.subr.mxu0 0.0
          %644 = vmatpush1.msra.mxu0 0.0
          %645 = vmatprep.subr.mxu0 0.0
          %646 = vmatpush1.msra.mxu0 0.0
          %647 = vmatprep.subr.mxu0 0.0
          %648 = vmatpush1.msra.mxu0 0.0
          %649 = vmatprep.subr.mxu0 0.0
          %650 = vmatpush1.msra.mxu0 0.0
          %651 = vmatprep.subr.mxu0 0.0
          %652 = vmatpush1.msra.mxu0 0.0
          %653 = vmatprep.subr.mxu0 0.0
          %654 = vmatpush1.msra.mxu0 0.0
          %655 = vmatprep.subr.mxu0 0.0
          %656 = vmatpush1.msra.mxu0 0.0
          %657 = vmatprep.subr.mxu0 0.0
          %658 = vmatpush1.msra.mxu0 0.0
          %659 = vmatprep.mubr.f32.mxu0 0.0
          %v660 = vand.u32 %v400, 4294901760
          %661 = vmatmul.mubr.f32.gmra.mrb[0].mxu0 %v660
          %v662 = vpop.f32.mrb[0].mxu0
          %v663 = vadd.f32 %v512, %v662
          %v664 = vpop.f32.mrb[0].mxu0
          %665 = vdwg.mxu0
          %666 = vmatprep.subr.mxu0 0.0
          %v667 = vand.u32 %v401, 4294901760
          %v668 = vsub.f32 %v401, %v667
          %669 = vmatpush1.msra.mxu0 %v668
          %670 = vmatprep.subr.mxu0 0.0
          %v671 = vand.u32 %v402, 4294901760
          %v672 = vsub.f32 %v402, %v671
          %673 = vmatpush1.msra.mxu0 %v672
          %674 = vmatprep.subr.mxu0 0.0
          %v675 = vand.u32 %v403, 4294901760
          %v676 = vsub.f32 %v403, %v675
          %677 = vmatpush1.msra.mxu0 %v676
          %678 = vmatprep.subr.mxu0 0.0
          %v679 = vand.u32 %v404, 4294901760
          %v680 = vsub.f32 %v404, %v679
          %681 = vmatpush1.msra.mxu0 %v680
          %682 = vmatprep.subr.mxu0 0.0
          %v683 = vand.u32 %v405, 4294901760
          %v684 = vsub.f32 %v405, %v683
          %685 = vmatpush1.msra.mxu0 %v684
          %686 = vmatprep.subr.mxu0 0.0
          %v687 = vand.u32 %v406, 4294901760
          %v688 = vsub.f32 %v406, %v687
          %689 = vmatpush1.msra.mxu0 %v688
          %690 = vmatprep.subr.mxu0 0.0
          %v691 = vand.u32 %v407, 4294901760
          %v692 = vsub.f32 %v407, %v691
          %693 = vmatpush1.msra.mxu0 %v692
          %694 = vmatprep.subr.mxu0 0.0
          %v695 = vand.u32 %v408, 4294901760
          %v696 = vsub.f32 %v408, %v695
          %697 = vmatpush1.msra.mxu0 %v696
          %698 = vmatprep.subr.mxu0 0.0
          %v699 = vand.u32 %v409, 4294901760
          %v700 = vsub.f32 %v409, %v699
          %701 = vmatpush1.msra.mxu0 %v700
          %702 = vmatprep.subr.mxu0 0.0
          %v703 = vand.u32 %v410, 4294901760
          %v704 = vsub.f32 %v410, %v703
          %705 = vmatpush1.msra.mxu0 %v704
          %706 = vmatprep.subr.mxu0 0.0
          %v707 = vand.u32 %v411, 4294901760
          %v708 = vsub.f32 %v411, %v707
          %709 = vmatpush1.msra.mxu0 %v708
          %710 = vmatprep.subr.mxu0 0.0
          %v711 = vand.u32 %v412, 4294901760
          %v712 = vsub.f32 %v412, %v711
          %713 = vmatpush1.msra.mxu0 %v712
          %714 = vmatprep.subr.mxu0 0.0
          %v715 = vand.u32 %v413, 4294901760
          %v716 = vsub.f32 %v413, %v715
          %717 = vmatpush1.msra.mxu0 %v716
          %718 = vmatprep.subr.mxu0 0.0
          %v719 = vand.u32 %v414, 4294901760
          %v720 = vsub.f32 %v414, %v719
          %721 = vmatpush1.msra.mxu0 %v720
          %722 = vmatprep.subr.mxu0 0.0
          %v723 = vand.u32 %v415, 4294901760
          %v724 = vsub.f32 %v415, %v723
          %725 = vmatpush1.msra.mxu0 %v724
          %726 = vmatprep.subr.mxu0 0.0
          %v727 = vand.u32 %v416, 4294901760
          %v728 = vsub.f32 %v416, %v727
          %729 = vmatpush1.msra.mxu0 %v728
          %730 = vmatprep.subr.mxu0 0.0
          %731 = vmatpush1.msra.mxu0 0.0
          %732 = vmatprep.subr.mxu0 0.0
          %733 = vmatpush1.msra.mxu0 0.0
          %734 = vmatprep.subr.mxu0 0.0
          %735 = vmatpush1.msra.mxu0 0.0
          %736 = vmatprep.subr.mxu0 0.0
          %737 = vmatpush1.msra.mxu0 0.0
          %738 = vmatprep.subr.mxu0 0.0
          %739 = vmatpush1.msra.mxu0 0.0
          %740 = vmatprep.subr.mxu0 0.0
          %741 = vmatpush1.msra.mxu0 0.0
          %742 = vmatprep.subr.mxu0 0.0
          %743 = vmatpush1.msra.mxu0 0.0
          %744 = vmatprep.subr.mxu0 0.0
          %745 = vmatpush1.msra.mxu0 0.0
          %746 = vmatprep.subr.mxu0 0.0
          %747 = vmatpush1.msra.mxu0 0.0
          %748 = vmatprep.subr.mxu0 0.0
          %749 = vmatpush1.msra.mxu0 0.0
          %750 = vmatprep.subr.mxu0 0.0
          %751 = vmatpush1.msra.mxu0 0.0
          %752 = vmatprep.subr.mxu0 0.0
          %753 = vmatpush1.msra.mxu0 0.0
          %754 = vmatprep.subr.mxu0 0.0
          %755 = vmatpush1.msra.mxu0 0.0
          %756 = vmatprep.subr.mxu0 0.0
          %757 = vmatpush1.msra.mxu0 0.0
          %758 = vmatprep.subr.mxu0 0.0
          %759 = vmatpush1.msra.mxu0 0.0
          %760 = vmatprep.subr.mxu0 0.0
          %761 = vmatpush1.msra.mxu0 0.0
          %762 = vmatprep.mubr.f32.mxu0 0.0
          %v763 = vand.u32 %v400, 4294901760
          %v764 = vsub.f32 %v400, %v763
          %765 = vmatmul.mubr.f32.gmra.mrb[0].mxu0 %v764
          %v766 = vpop.f32.mrb[0].mxu0
          %v767 = vadd.f32 %v663, %v766
          %v768 = vpop.f32.mrb[0].mxu0
          %769 = vdwg.mxu0
          %770 = vmatprep.subr.mxu0 0.0
          %v771 = vand.u32 %v401, 4294901760
          %772 = vmatpush1.msra.mxu0 %v771
          %773 = vmatprep.subr.mxu0 0.0
          %v774 = vand.u32 %v402, 4294901760
          %775 = vmatpush1.msra.mxu0 %v774
          %776 = vmatprep.subr.mxu0 0.0
          %v777 = vand.u32 %v403, 4294901760
          %778 = vmatpush1.msra.mxu0 %v777
          %779 = vmatprep.subr.mxu0 0.0
          %v780 = vand.u32 %v404, 4294901760
          %781 = vmatpush1.msra.mxu0 %v780
          %782 = vmatprep.subr.mxu0 0.0
          %v783 = vand.u32 %v405, 4294901760
          %784 = vmatpush1.msra.mxu0 %v783
          %785 = vmatprep.subr.mxu0 0.0
          %v786 = vand.u32 %v406, 4294901760
          %787 = vmatpush1.msra.mxu0 %v786
          %788 = vmatprep.subr.mxu0 0.0
          %v789 = vand.u32 %v407, 4294901760
          %790 = vmatpush1.msra.mxu0 %v789
          %791 = vmatprep.subr.mxu0 0.0
          %v792 = vand.u32 %v408, 4294901760
          %793 = vmatpush1.msra.mxu0 %v792
          %794 = vmatprep.subr.mxu0 0.0
          %v795 = vand.u32 %v409, 4294901760
          %796 = vmatpush1.msra.mxu0 %v795
          %797 = vmatprep.subr.mxu0 0.0
          %v798 = vand.u32 %v410, 4294901760
          %799 = vmatpush1.msra.mxu0 %v798
          %800 = vmatprep.subr.mxu0 0.0
          %v801 = vand.u32 %v411, 4294901760
          %802 = vmatpush1.msra.mxu0 %v801
          %803 = vmatprep.subr.mxu0 0.0
          %v804 = vand.u32 %v412, 4294901760
          %805 = vmatpush1.msra.mxu0 %v804
          %806 = vmatprep.subr.mxu0 0.0
          %v807 = vand.u32 %v413, 4294901760
          %808 = vmatpush1.msra.mxu0 %v807
          %809 = vmatprep.subr.mxu0 0.0
          %v810 = vand.u32 %v414, 4294901760
          %811 = vmatpush1.msra.mxu0 %v810
          %812 = vmatprep.subr.mxu0 0.0
          %v813 = vand.u32 %v415, 4294901760
          %814 = vmatpush1.msra.mxu0 %v813
          %815 = vmatprep.subr.mxu0 0.0
          %v816 = vand.u32 %v416, 4294901760
          %817 = vmatpush1.msra.mxu0 %v816
          %818 = vmatprep.subr.mxu0 0.0
          %819 = vmatpush1.msra.mxu0 0.0
          %820 = vmatprep.subr.mxu0 0.0
          %821 = vmatpush1.msra.mxu0 0.0
          %822 = vmatprep.subr.mxu0 0.0
          %823 = vmatpush1.msra.mxu0 0.0
          %824 = vmatprep.subr.mxu0 0.0
          %825 = vmatpush1.msra.mxu0 0.0
          %826 = vmatprep.subr.mxu0 0.0
          %827 = vmatpush1.msra.mxu0 0.0
          %828 = vmatprep.subr.mxu0 0.0
          %829 = vmatpush1.msra.mxu0 0.0
          %830 = vmatprep.subr.mxu0 0.0
          %831 = vmatpush1.msra.mxu0 0.0
          %832 = vmatprep.subr.mxu0 0.0
          %833 = vmatpush1.msra.mxu0 0.0
          %834 = vmatprep.subr.mxu0 0.0
          %835 = vmatpush1.msra.mxu0 0.0
          %836 = vmatprep.subr.mxu0 0.0
          %837 = vmatpush1.msra.mxu0 0.0
          %838 = vmatprep.subr.mxu0 0.0
          %839 = vmatpush1.msra.mxu0 0.0
          %840 = vmatprep.subr.mxu0 0.0
          %841 = vmatpush1.msra.mxu0 0.0
          %842 = vmatprep.subr.mxu0 0.0
          %843 = vmatpush1.msra.mxu0 0.0
          %844 = vmatprep.subr.mxu0 0.0
          %845 = vmatpush1.msra.mxu0 0.0
          %846 = vmatprep.subr.mxu0 0.0
          %847 = vmatpush1.msra.mxu0 0.0
          %848 = vmatprep.subr.mxu0 0.0
          %849 = vmatpush1.msra.mxu0 0.0
          %850 = vmatprep.mubr.f32.mxu0 0.0
          %v851 = vand.u32 %v400, 4294901760
          %v852 = vsub.f32 %v400, %v851
          %v853 = vand.u32 %v852, 4294901760
          %854 = vmatmul.mubr.f32.gmra.mrb[0].mxu0 %v853
          %v855 = vpop.f32.mrb[0].mxu0
          %v856 = vadd.f32 %v767, %v855
          %v857 = vpop.f32.mrb[0].mxu0
          %858 = vdwg.mxu0
          %859 = vmatprep.subr.mxu0 0.0
          %v860 = vand.u32 %v401, 4294901760
          %v861 = vsub.f32 %v401, %v860
          %v862 = vand.u32 %v861, 4294901760
          %863 = vmatpush1.msra.mxu0 %v862
          %864 = vmatprep.subr.mxu0 0.0
          %v865 = vand.u32 %v402, 4294901760
          %v866 = vsub.f32 %v402, %v865
          %v867 = vand.u32 %v866, 4294901760
          %868 = vmatpush1.msra.mxu0 %v867
          %869 = vmatprep.subr.mxu0 0.0
          %v870 = vand.u32 %v403, 4294901760
          %v871 = vsub.f32 %v403, %v870
          %v872 = vand.u32 %v871, 4294901760
          %873 = vmatpush1.msra.mxu0 %v872
          %874 = vmatprep.subr.mxu0 0.0
          %v875 = vand.u32 %v404, 4294901760
          %v876 = vsub.f32 %v404, %v875
          %v877 = vand.u32 %v876, 4294901760
          %878 = vmatpush1.msra.mxu0 %v877
          %879 = vmatprep.subr.mxu0 0.0
          %v880 = vand.u32 %v405, 4294901760
          %v881 = vsub.f32 %v405, %v880
          %v882 = vand.u32 %v881, 4294901760
          %883 = vmatpush1.msra.mxu0 %v882
          %884 = vmatprep.subr.mxu0 0.0
          %v885 = vand.u32 %v406, 4294901760
          %v886 = vsub.f32 %v406, %v885
          %v887 = vand.u32 %v886, 4294901760
          %888 = vmatpush1.msra.mxu0 %v887
          %889 = vmatprep.subr.mxu0 0.0
          %v890 = vand.u32 %v407, 4294901760
          %v891 = vsub.f32 %v407, %v890
          %v892 = vand.u32 %v891, 4294901760
          %893 = vmatpush1.msra.mxu0 %v892
          %894 = vmatprep.subr.mxu0 0.0
          %v895 = vand.u32 %v408, 4294901760
          %v896 = vsub.f32 %v408, %v895
          %v897 = vand.u32 %v896, 4294901760
          %898 = vmatpush1.msra.mxu0 %v897
          %899 = vmatprep.subr.mxu0 0.0
          %v900 = vand.u32 %v409, 4294901760
          %v901 = vsub.f32 %v409, %v900
          %v902 = vand.u32 %v901, 4294901760
          %903 = vmatpush1.msra.mxu0 %v902
          %904 = vmatprep.subr.mxu0 0.0
          %v905 = vand.u32 %v410, 4294901760
          %v906 = vsub.f32 %v410, %v905
          %v907 = vand.u32 %v906, 4294901760
          %908 = vmatpush1.msra.mxu0 %v907
          %909 = vmatprep.subr.mxu0 0.0
          %v910 = vand.u32 %v411, 4294901760
          %v911 = vsub.f32 %v411, %v910
          %v912 = vand.u32 %v911, 4294901760
          %913 = vmatpush1.msra.mxu0 %v912
          %914 = vmatprep.subr.mxu0 0.0
          %v915 = vand.u32 %v412, 4294901760
          %v916 = vsub.f32 %v412, %v915
          %v917 = vand.u32 %v916, 4294901760
          %918 = vmatpush1.msra.mxu0 %v917
          %919 = vmatprep.subr.mxu0 0.0
          %v920 = vand.u32 %v413, 4294901760
          %v921 = vsub.f32 %v413, %v920
          %v922 = vand.u32 %v921, 4294901760
          %923 = vmatpush1.msra.mxu0 %v922
          %924 = vmatprep.subr.mxu0 0.0
          %v925 = vand.u32 %v414, 4294901760
          %v926 = vsub.f32 %v414, %v925
          %v927 = vand.u32 %v926, 4294901760
          %928 = vmatpush1.msra.mxu0 %v927
          %929 = vmatprep.subr.mxu0 0.0
          %v930 = vand.u32 %v415, 4294901760
          %v931 = vsub.f32 %v415, %v930
          %v932 = vand.u32 %v931, 4294901760
          %933 = vmatpush1.msra.mxu0 %v932
          %934 = vmatprep.subr.mxu0 0.0
          %v935 = vand.u32 %v416, 4294901760
          %v936 = vsub.f32 %v416, %v935
          %v937 = vand.u32 %v936, 4294901760
          %938 = vmatpush1.msra.mxu0 %v937
          %939 = vmatprep.subr.mxu0 0.0
          %940 = vmatpush1.msra.mxu0 0.0
          %941 = vmatprep.subr.mxu0 0.0
          %942 = vmatpush1.msra.mxu0 0.0
          %943 = vmatprep.subr.mxu0 0.0
          %944 = vmatpush1.msra.mxu0 0.0
          %945 = vmatprep.subr.mxu0 0.0
          %946 = vmatpush1.msra.mxu0 0.0
          %947 = vmatprep.subr.mxu0 0.0
          %948 = vmatpush1.msra.mxu0 0.0
          %949 = vmatprep.subr.mxu0 0.0
          %950 = vmatpush1.msra.mxu0 0.0
          %951 = vmatprep.subr.mxu0 0.0
          %952 = vmatpush1.msra.mxu0 0.0
          %953 = vmatprep.subr.mxu0 0.0
          %954 = vmatpush1.msra.mxu0 0.0
          %955 = vmatprep.subr.mxu0 0.0
          %956 = vmatpush1.msra.mxu0 0.0
          %957 = vmatprep.subr.mxu0 0.0
          %958 = vmatpush1.msra.mxu0 0.0
          %959 = vmatprep.subr.mxu0 0.0
          %960 = vmatpush1.msra.mxu0 0.0
          %961 = vmatprep.subr.mxu0 0.0
          %962 = vmatpush1.msra.mxu0 0.0
          %963 = vmatprep.subr.mxu0 0.0
          %964 = vmatpush1.msra.mxu0 0.0
          %965 = vmatprep.subr.mxu0 0.0
          %966 = vmatpush1.msra.mxu0 0.0
          %967 = vmatprep.subr.mxu0 0.0
          %968 = vmatpush1.msra.mxu0 0.0
          %969 = vmatprep.subr.mxu0 0.0
          %970 = vmatpush1.msra.mxu0 0.0
          %971 = vmatprep.mubr.f32.mxu0 0.0
          %v972 = vand.u32 %v400, 4294901760
          %973 = vmatmul.mubr.f32.gmra.mrb[0].mxu0 %v972
          %v974 = vpop.f32.mrb[0].mxu0
          %v975 = vadd.f32 %v856, %v974
          %v976 = vpop.f32.mrb[0].mxu0
          %977 = vdwg.mxu0
          %978 = vmatprep.subr.mxu0 0.0
          %v979 = vand.u32 %v401, 4294901760
          %980 = vmatpush1.msra.mxu0 %v979
          %981 = vmatprep.subr.mxu0 0.0
          %v982 = vand.u32 %v402, 4294901760
          %983 = vmatpush1.msra.mxu0 %v982
          %984 = vmatprep.subr.mxu0 0.0
          %v985 = vand.u32 %v403, 4294901760
          %986 = vmatpush1.msra.mxu0 %v985
          %987 = vmatprep.subr.mxu0 0.0
          %v988 = vand.u32 %v404, 4294901760
          %989 = vmatpush1.msra.mxu0 %v988
          %990 = vmatprep.subr.mxu0 0.0
          %v991 = vand.u32 %v405, 4294901760
          %992 = vmatpush1.msra.mxu0 %v991
          %993 = vmatprep.subr.mxu0 0.0
          %v994 = vand.u32 %v406, 4294901760
          %995 = vmatpush1.msra.mxu0 %v994
          %996 = vmatprep.subr.mxu0 0.0
          %v997 = vand.u32 %v407, 4294901760
          %998 = vmatpush1.msra.mxu0 %v997
          %999 = vmatprep.subr.mxu0 0.0
          %v1000 = vand.u32 %v408, 4294901760
          %1001 = vmatpush1.msra.mxu0 %v1000
          %1002 = vmatprep.subr.mxu0 0.0
          %v1003 = vand.u32 %v409, 4294901760
          %1004 = vmatpush1.msra.mxu0 %v1003
          %1005 = vmatprep.subr.mxu0 0.0
          %v1006 = vand.u32 %v410, 4294901760
          %1007 = vmatpush1.msra.mxu0 %v1006
          %1008 = vmatprep.subr.mxu0 0.0
          %v1009 = vand.u32 %v411, 4294901760
          %1010 = vmatpush1.msra.mxu0 %v1009
          %1011 = vmatprep.subr.mxu0 0.0
          %v1012 = vand.u32 %v412, 4294901760
          %1013 = vmatpush1.msra.mxu0 %v1012
          %1014 = vmatprep.subr.mxu0 0.0
          %v1015 = vand.u32 %v413, 4294901760
          %1016 = vmatpush1.msra.mxu0 %v1015
          %1017 = vmatprep.subr.mxu0 0.0
          %v1018 = vand.u32 %v414, 4294901760
          %1019 = vmatpush1.msra.mxu0 %v1018
          %1020 = vmatprep.subr.mxu0 0.0
          %v1021 = vand.u32 %v415, 4294901760
          %1022 = vmatpush1.msra.mxu0 %v1021
          %1023 = vmatprep.subr.mxu0 0.0
          %v1024 = vand.u32 %v416, 4294901760
          %1025 = vmatpush1.msra.mxu0 %v1024
          %1026 = vmatprep.subr.mxu0 0.0
          %1027 = vmatpush1.msra.mxu0 0.0
          %1028 = vmatprep.subr.mxu0 0.0
          %1029 = vmatpush1.msra.mxu0 0.0
          %1030 = vmatprep.subr.mxu0 0.0
          %1031 = vmatpush1.msra.mxu0 0.0
          %1032 = vmatprep.subr.mxu0 0.0
          %1033 = vmatpush1.msra.mxu0 0.0
          %1034 = vmatprep.subr.mxu0 0.0
          %1035 = vmatpush1.msra.mxu0 0.0
          %1036 = vmatprep.subr.mxu0 0.0
          %1037 = vmatpush1.msra.mxu0 0.0
          %1038 = vmatprep.subr.mxu0 0.0
          %1039 = vmatpush1.msra.mxu0 0.0
          %1040 = vmatprep.subr.mxu0 0.0
          %1041 = vmatpush1.msra.mxu0 0.0
          %1042 = vmatprep.subr.mxu0 0.0
          %1043 = vmatpush1.msra.mxu0 0.0
          %1044 = vmatprep.subr.mxu0 0.0
          %1045 = vmatpush1.msra.mxu0 0.0
          %1046 = vmatprep.subr.mxu0 0.0
          %1047 = vmatpush1.msra.mxu0 0.0
          %1048 = vmatprep.subr.mxu0 0.0
          %1049 = vmatpush1.msra.mxu0 0.0
          %1050 = vmatprep.subr.mxu0 0.0
          %1051 = vmatpush1.msra.mxu0 0.0
          %1052 = vmatprep.subr.mxu0 0.0
          %1053 = vmatpush1.msra.mxu0 0.0
          %1054 = vmatprep.subr.mxu0 0.0
          %1055 = vmatpush1.msra.mxu0 0.0
          %1056 = vmatprep.subr.mxu0 0.0
          %1057 = vmatpush1.msra.mxu0 0.0
          %1058 = vmatprep.mubr.f32.mxu0 0.0
          %v1059 = vand.u32 %v400, 4294901760
          %1060 = vmatmul.mubr.f32.gmra.mrb[0].mxu0 %v1059
          %v1061 = vpop.f32.mrb[0].mxu0
          %v1062 = vadd.f32 %v975, %v1061
          %v1063 = vpop.f32.mrb[0].mxu0
          %1064 = vdwg.mxu0
          %v1065 = vmax.f32 %v1062, 0.0
          %v1066 = vld [vmem:[#allocation8] sm:$0xff]
          %v1067 = vld [vmem:[#allocation8 + $0x8] sm:$0xff]
          %v1068 = vld [vmem:[#allocation8 + $0x10] sm:$0xff]
          %v1069 = vld [vmem:[#allocation8 + $0x18] sm:$0xff]
          %v1070 = vld [vmem:[#allocation8 + $0x20] sm:$0xff]
          %v1071 = vld [vmem:[#allocation8 + $0x28] sm:$0xff]
          %v1072 = vld [vmem:[#allocation8 + $0x30] sm:$0xff]
          %v1073 = vld [vmem:[#allocation8 + $0x38] sm:$0xff]
          %v1074 = vld [vmem:[#allocation8 + $0x40] sm:$0xff]
          %v1075 = vld [vmem:[#allocation8 + $0x48] sm:$0xff]
          %v1076 = vld [vmem:[#allocation8 + $0x50] sm:$0xff]
          %v1077 = vld [vmem:[#allocation8 + $0x58] sm:$0xff]
          %v1078 = vld [vmem:[#allocation8 + $0x60] sm:$0xff]
          %v1079 = vld [vmem:[#allocation8 + $0x68] sm:$0xff]
          %v1080 = vld [vmem:[#allocation8 + $0x70] sm:$0xff]
          %v1081 = vld [vmem:[#allocation8 + $0x78] sm:$0xff]
          %v1082 = vld [vmem:[%s6] sm:$0x1]
          %v1084 = vlaneseq
          %v1085 = vshrl.u32 %v1084, 7
          %v1086 = vsub.s32 0, %v1085
          %v1087 = vrot.slane %v1082, %v1086
          %1089 = vmatprep.subr.mxu0 0.0
          %v1090 = vand.u32 %v1066, 4294901760
          %1091 = vmatpush1.msra.mxu0 %v1090
          %1092 = vmatprep.subr.mxu0 0.0
          %v1093 = vand.u32 %v1067, 4294901760
          %1094 = vmatpush1.msra.mxu0 %v1093
          %1095 = vmatprep.subr.mxu0 0.0
          %v1096 = vand.u32 %v1068, 4294901760
          %1097 = vmatpush1.msra.mxu0 %v1096
          %1098 = vmatprep.subr.mxu0 0.0
          %v1099 = vand.u32 %v1069, 4294901760
          %1100 = vmatpush1.msra.mxu0 %v1099
          %1101 = vmatprep.subr.mxu0 0.0
          %v1102 = vand.u32 %v1070, 4294901760
          %1103 = vmatpush1.msra.mxu0 %v1102
          %1104 = vmatprep.subr.mxu0 0.0
          %v1105 = vand.u32 %v1071, 4294901760
          %1106 = vmatpush1.msra.mxu0 %v1105
          %1107 = vmatprep.subr.mxu0 0.0
          %v1108 = vand.u32 %v1072, 4294901760
          %1109 = vmatpush1.msra.mxu0 %v1108
          %1110 = vmatprep.subr.mxu0 0.0
          %v1111 = vand.u32 %v1073, 4294901760
          %1112 = vmatpush1.msra.mxu0 %v1111
          %1113 = vmatprep.subr.mxu0 0.0
          %v1114 = vand.u32 %v1074, 4294901760
          %1115 = vmatpush1.msra.mxu0 %v1114
          %1116 = vmatprep.subr.mxu0 0.0
          %v1117 = vand.u32 %v1075, 4294901760
          %1118 = vmatpush1.msra.mxu0 %v1117
          %1119 = vmatprep.subr.mxu0 0.0
          %v1120 = vand.u32 %v1076, 4294901760
          %1121 = vmatpush1.msra.mxu0 %v1120
          %1122 = vmatprep.subr.mxu0 0.0
          %v1123 = vand.u32 %v1077, 4294901760
          %1124 = vmatpush1.msra.mxu0 %v1123
          %1125 = vmatprep.subr.mxu0 0.0
          %v1126 = vand.u32 %v1078, 4294901760
          %1127 = vmatpush1.msra.mxu0 %v1126
          %1128 = vmatprep.subr.mxu0 0.0
          %v1129 = vand.u32 %v1079, 4294901760
          %1130 = vmatpush1.msra.mxu0 %v1129
          %1131 = vmatprep.subr.mxu0 0.0
          %v1132 = vand.u32 %v1080, 4294901760
          %1133 = vmatpush1.msra.mxu0 %v1132
          %1134 = vmatprep.subr.mxu0 0.0
          %v1135 = vand.u32 %v1081, 4294901760
          %1136 = vmatpush1.msra.mxu0 %v1135
          %1137 = vmatprep.subr.mxu0 0.0
          %1138 = vmatpush1.msra.mxu0 0.0
          %1139 = vmatprep.subr.mxu0 0.0
          %1140 = vmatpush1.msra.mxu0 0.0
          %1141 = vmatprep.subr.mxu0 0.0
          %1142 = vmatpush1.msra.mxu0 0.0
          %1143 = vmatprep.subr.mxu0 0.0
          %1144 = vmatpush1.msra.mxu0 0.0
          %1145 = vmatprep.subr.mxu0 0.0
          %1146 = vmatpush1.msra.mxu0 0.0
          %1147 = vmatprep.subr.mxu0 0.0
          %1148 = vmatpush1.msra.mxu0 0.0
          %1149 = vmatprep.subr.mxu0 0.0
          %1150 = vmatpush1.msra.mxu0 0.0
          %1151 = vmatprep.subr.mxu0 0.0
          %1152 = vmatpush1.msra.mxu0 0.0
          %1153 = vmatprep.subr.mxu0 0.0
          %1154 = vmatpush1.msra.mxu0 0.0
          %1155 = vmatprep.subr.mxu0 0.0
          %1156 = vmatpush1.msra.mxu0 0.0
          %1157 = vmatprep.subr.mxu0 0.0
          %1158 = vmatpush1.msra.mxu0 0.0
          %1159 = vmatprep.subr.mxu0 0.0
          %1160 = vmatpush1.msra.mxu0 0.0
          %1161 = vmatprep.subr.mxu0 0.0
          %1162 = vmatpush1.msra.mxu0 0.0
          %1163 = vmatprep.subr.mxu0 0.0
          %1164 = vmatpush1.msra.mxu0 0.0
          %1165 = vmatprep.subr.mxu0 0.0
          %1166 = vmatpush1.msra.mxu0 0.0
          %1167 = vmatprep.subr.mxu0 0.0
          %1168 = vmatpush1.msra.mxu0 0.0
          %1169 = vmatprep.mubr.f32.mxu0 0.0
          %v1170 = vand.u32 %v1065, 4294901760
          %v1171 = vsub.f32 %v1065, %v1170
          %v1172 = vand.u32 %v1171, 4294901760
          %v1173 = vsub.f32 %v1171, %v1172
          %v1174 = vand.u32 %v1173, 4294901760
          %1175 = vmatmul.mubr.f32.gmra.mrb[0].mxu0 %v1174
          %v1176 = vpop.f32.mrb[0].mxu0
          %v1177 = vadd.f32 %v1087, %v1176
          %v1178 = vpop.f32.mrb[0].mxu0
          %1179 = vdwg.mxu0
          %1180 = vmatprep.subr.mxu0 0.0
          %v1181 = vand.u32 %v1066, 4294901760
          %v1182 = vsub.f32 %v1066, %v1181
          %v1183 = vand.u32 %v1182, 4294901760
          %v1184 = vsub.f32 %v1182, %v1183
          %v1185 = vand.u32 %v1184, 4294901760
          %1186 = vmatpush1.msra.mxu0 %v1185
          %1187 = vmatprep.subr.mxu0 0.0
          %v1188 = vand.u32 %v1067, 4294901760
          %v1189 = vsub.f32 %v1067, %v1188
          %v1190 = vand.u32 %v1189, 4294901760
          %v1191 = vsub.f32 %v1189, %v1190
          %v1192 = vand.u32 %v1191, 4294901760
          %1193 = vmatpush1.msra.mxu0 %v1192
          %1194 = vmatprep.subr.mxu0 0.0
          %v1195 = vand.u32 %v1068, 4294901760
          %v1196 = vsub.f32 %v1068, %v1195
          %v1197 = vand.u32 %v1196, 4294901760
          %v1198 = vsub.f32 %v1196, %v1197
          %v1199 = vand.u32 %v1198, 4294901760
          %1200 = vmatpush1.msra.mxu0 %v1199
          %1201 = vmatprep.subr.mxu0 0.0
          %v1202 = vand.u32 %v1069, 4294901760
          %v1203 = vsub.f32 %v1069, %v1202
          %v1204 = vand.u32 %v1203, 4294901760
          %v1205 = vsub.f32 %v1203, %v1204
          %v1206 = vand.u32 %v1205, 4294901760
          %1207 = vmatpush1.msra.mxu0 %v1206
          %1208 = vmatprep.subr.mxu0 0.0
          %v1209 = vand.u32 %v1070, 4294901760
          %v1210 = vsub.f32 %v1070, %v1209
          %v1211 = vand.u32 %v1210, 4294901760
          %v1212 = vsub.f32 %v1210, %v1211
          %v1213 = vand.u32 %v1212, 4294901760
          %1214 = vmatpush1.msra.mxu0 %v1213
          %1215 = vmatprep.subr.mxu0 0.0
          %v1216 = vand.u32 %v1071, 4294901760
          %v1217 = vsub.f32 %v1071, %v1216
          %v1218 = vand.u32 %v1217, 4294901760
          %v1219 = vsub.f32 %v1217, %v1218
          %v1220 = vand.u32 %v1219, 4294901760
          %1221 = vmatpush1.msra.mxu0 %v1220
          %1222 = vmatprep.subr.mxu0 0.0
          %v1223 = vand.u32 %v1072, 4294901760
          %v1224 = vsub.f32 %v1072, %v1223
          %v1225 = vand.u32 %v1224, 4294901760
          %v1226 = vsub.f32 %v1224, %v1225
          %v1227 = vand.u32 %v1226, 4294901760
          %1228 = vmatpush1.msra.mxu0 %v1227
          %1229 = vmatprep.subr.mxu0 0.0
          %v1230 = vand.u32 %v1073, 4294901760
          %v1231 = vsub.f32 %v1073, %v1230
          %v1232 = vand.u32 %v1231, 4294901760
          %v1233 = vsub.f32 %v1231, %v1232
          %v1234 = vand.u32 %v1233, 4294901760
          %1235 = vmatpush1.msra.mxu0 %v1234
          %1236 = vmatprep.subr.mxu0 0.0
          %v1237 = vand.u32 %v1074, 4294901760
          %v1238 = vsub.f32 %v1074, %v1237
          %v1239 = vand.u32 %v1238, 4294901760
          %v1240 = vsub.f32 %v1238, %v1239
          %v1241 = vand.u32 %v1240, 4294901760
          %1242 = vmatpush1.msra.mxu0 %v1241
          %1243 = vmatprep.subr.mxu0 0.0
          %v1244 = vand.u32 %v1075, 4294901760
          %v1245 = vsub.f32 %v1075, %v1244
          %v1246 = vand.u32 %v1245, 4294901760
          %v1247 = vsub.f32 %v1245, %v1246
          %v1248 = vand.u32 %v1247, 4294901760
          %1249 = vmatpush1.msra.mxu0 %v1248
          %1250 = vmatprep.subr.mxu0 0.0
          %v1251 = vand.u32 %v1076, 4294901760
          %v1252 = vsub.f32 %v1076, %v1251
          %v1253 = vand.u32 %v1252, 4294901760
          %v1254 = vsub.f32 %v1252, %v1253
          %v1255 = vand.u32 %v1254, 4294901760
          %1256 = vmatpush1.msra.mxu0 %v1255
          %1257 = vmatprep.subr.mxu0 0.0
          %v1258 = vand.u32 %v1077, 4294901760
          %v1259 = vsub.f32 %v1077, %v1258
          %v1260 = vand.u32 %v1259, 4294901760
          %v1261 = vsub.f32 %v1259, %v1260
          %v1262 = vand.u32 %v1261, 4294901760
          %1263 = vmatpush1.msra.mxu0 %v1262
          %1264 = vmatprep.subr.mxu0 0.0
          %v1265 = vand.u32 %v1078, 4294901760
          %v1266 = vsub.f32 %v1078, %v1265
          %v1267 = vand.u32 %v1266, 4294901760
          %v1268 = vsub.f32 %v1266, %v1267
          %v1269 = vand.u32 %v1268, 4294901760
          %1270 = vmatpush1.msra.mxu0 %v1269
          %1271 = vmatprep.subr.mxu0 0.0
          %v1272 = vand.u32 %v1079, 4294901760
          %v1273 = vsub.f32 %v1079, %v1272
          %v1274 = vand.u32 %v1273, 4294901760
          %v1275 = vsub.f32 %v1273, %v1274
          %v1276 = vand.u32 %v1275, 4294901760
          %1277 = vmatpush1.msra.mxu0 %v1276
          %1278 = vmatprep.subr.mxu0 0.0
          %v1279 = vand.u32 %v1080, 4294901760
          %v1280 = vsub.f32 %v1080, %v1279
          %v1281 = vand.u32 %v1280, 4294901760
          %v1282 = vsub.f32 %v1280, %v1281
          %v1283 = vand.u32 %v1282, 4294901760
          %1284 = vmatpush1.msra.mxu0 %v1283
          %1285 = vmatprep.subr.mxu0 0.0
          %v1286 = vand.u32 %v1081, 4294901760
          %v1287 = vsub.f32 %v1081, %v1286
          %v1288 = vand.u32 %v1287, 4294901760
          %v1289 = vsub.f32 %v1287, %v1288
          %v1290 = vand.u32 %v1289, 4294901760
          %1291 = vmatpush1.msra.mxu0 %v1290
          %1292 = vmatprep.subr.mxu0 0.0
          %1293 = vmatpush1.msra.mxu0 0.0
          %1294 = vmatprep.subr.mxu0 0.0
          %1295 = vmatpush1.msra.mxu0 0.0
          %1296 = vmatprep.subr.mxu0 0.0
          %1297 = vmatpush1.msra.mxu0 0.0
          %1298 = vmatprep.subr.mxu0 0.0
          %1299 = vmatpush1.msra.mxu0 0.0
          %1300 = vmatprep.subr.mxu0 0.0
          %1301 = vmatpush1.msra.mxu0 0.0
          %1302 = vmatprep.subr.mxu0 0.0
          %1303 = vmatpush1.msra.mxu0 0.0
          %1304 = vmatprep.subr.mxu0 0.0
          %1305 = vmatpush1.msra.mxu0 0.0
          %1306 = vmatprep.subr.mxu0 0.0
          %1307 = vmatpush1.msra.mxu0 0.0
          %1308 = vmatprep.subr.mxu0 0.0
          %1309 = vmatpush1.msra.mxu0 0.0
          %1310 = vmatprep.subr.mxu0 0.0
          %1311 = vmatpush1.msra.mxu0 0.0
          %1312 = vmatprep.subr.mxu0 0.0
          %1313 = vmatpush1.msra.mxu0 0.0
          %1314 = vmatprep.subr.mxu0 0.0
          %1315 = vmatpush1.msra.mxu0 0.0
          %1316 = vmatprep.subr.mxu0 0.0
          %1317 = vmatpush1.msra.mxu0 0.0
          %1318 = vmatprep.subr.mxu0 0.0
          %1319 = vmatpush1.msra.mxu0 0.0
          %1320 = vmatprep.subr.mxu0 0.0
          %1321 = vmatpush1.msra.mxu0 0.0
          %1322 = vmatprep.subr.mxu0 0.0
          %1323 = vmatpush1.msra.mxu0 0.0
          %1324 = vmatprep.mubr.f32.mxu0 0.0
          %v1325 = vand.u32 %v1065, 4294901760
          %1326 = vmatmul.mubr.f32.gmra.mrb[0].mxu0 %v1325
          %v1327 = vpop.f32.mrb[0].mxu0
          %v1328 = vadd.f32 %v1177, %v1327
          %v1329 = vpop.f32.mrb[0].mxu0
          %1330 = vdwg.mxu0
          %1331 = vmatprep.subr.mxu0 0.0
          %v1332 = vand.u32 %v1066, 4294901760
          %v1333 = vsub.f32 %v1066, %v1332
          %1334 = vmatpush1.msra.mxu0 %v1333
          %1335 = vmatprep.subr.mxu0 0.0
          %v1336 = vand.u32 %v1067, 4294901760
          %v1337 = vsub.f32 %v1067, %v1336
          %1338 = vmatpush1.msra.mxu0 %v1337
          %1339 = vmatprep.subr.mxu0 0.0
          %v1340 = vand.u32 %v1068, 4294901760
          %v1341 = vsub.f32 %v1068, %v1340
          %1342 = vmatpush1.msra.mxu0 %v1341
          %1343 = vmatprep.subr.mxu0 0.0
          %v1344 = vand.u32 %v1069, 4294901760
          %v1345 = vsub.f32 %v1069, %v1344
          %1346 = vmatpush1.msra.mxu0 %v1345
          %1347 = vmatprep.subr.mxu0 0.0
          %v1348 = vand.u32 %v1070, 4294901760
          %v1349 = vsub.f32 %v1070, %v1348
          %1350 = vmatpush1.msra.mxu0 %v1349
          %1351 = vmatprep.subr.mxu0 0.0
          %v1352 = vand.u32 %v1071, 4294901760
          %v1353 = vsub.f32 %v1071, %v1352
          %1354 = vmatpush1.msra.mxu0 %v1353
          %1355 = vmatprep.subr.mxu0 0.0
          %v1356 = vand.u32 %v1072, 4294901760
          %v1357 = vsub.f32 %v1072, %v1356
          %1358 = vmatpush1.msra.mxu0 %v1357
          %1359 = vmatprep.subr.mxu0 0.0
          %v1360 = vand.u32 %v1073, 4294901760
          %v1361 = vsub.f32 %v1073, %v1360
          %1362 = vmatpush1.msra.mxu0 %v1361
          %1363 = vmatprep.subr.mxu0 0.0
          %v1364 = vand.u32 %v1074, 4294901760
          %v1365 = vsub.f32 %v1074, %v1364
          %1366 = vmatpush1.msra.mxu0 %v1365
          %1367 = vmatprep.subr.mxu0 0.0
          %v1368 = vand.u32 %v1075, 4294901760
          %v1369 = vsub.f32 %v1075, %v1368
          %1370 = vmatpush1.msra.mxu0 %v1369
          %1371 = vmatprep.subr.mxu0 0.0
          %v1372 = vand.u32 %v1076, 4294901760
          %v1373 = vsub.f32 %v1076, %v1372
          %1374 = vmatpush1.msra.mxu0 %v1373
          %1375 = vmatprep.subr.mxu0 0.0
          %v1376 = vand.u32 %v1077, 4294901760
          %v1377 = vsub.f32 %v1077, %v1376
          %1378 = vmatpush1.msra.mxu0 %v1377
          %1379 = vmatprep.subr.mxu0 0.0
          %v1380 = vand.u32 %v1078, 4294901760
          %v1381 = vsub.f32 %v1078, %v1380
          %1382 = vmatpush1.msra.mxu0 %v1381
          %1383 = vmatprep.subr.mxu0 0.0
          %v1384 = vand.u32 %v1079, 4294901760
          %v1385 = vsub.f32 %v1079, %v1384
          %1386 = vmatpush1.msra.mxu0 %v1385
          %1387 = vmatprep.subr.mxu0 0.0
          %v1388 = vand.u32 %v1080, 4294901760
          %v1389 = vsub.f32 %v1080, %v1388
          %1390 = vmatpush1.msra.mxu0 %v1389
          %1391 = vmatprep.subr.mxu0 0.0
          %v1392 = vand.u32 %v1081, 4294901760
          %v1393 = vsub.f32 %v1081, %v1392
          %1394 = vmatpush1.msra.mxu0 %v1393
          %1395 = vmatprep.subr.mxu0 0.0
          %1396 = vmatpush1.msra.mxu0 0.0
          %1397 = vmatprep.subr.mxu0 0.0
          %1398 = vmatpush1.msra.mxu0 0.0
          %1399 = vmatprep.subr.mxu0 0.0
          %1400 = vmatpush1.msra.mxu0 0.0
          %1401 = vmatprep.subr.mxu0 0.0
          %1402 = vmatpush1.msra.mxu0 0.0
          %1403 = vmatprep.subr.mxu0 0.0
          %1404 = vmatpush1.msra.mxu0 0.0
          %1405 = vmatprep.subr.mxu0 0.0
          %1406 = vmatpush1.msra.mxu0 0.0
          %1407 = vmatprep.subr.mxu0 0.0
          %1408 = vmatpush1.msra.mxu0 0.0
          %1409 = vmatprep.subr.mxu0 0.0
          %1410 = vmatpush1.msra.mxu0 0.0
          %1411 = vmatprep.subr.mxu0 0.0
          %1412 = vmatpush1.msra.mxu0 0.0
          %1413 = vmatprep.subr.mxu0 0.0
          %1414 = vmatpush1.msra.mxu0 0.0
          %1415 = vmatprep.subr.mxu0 0.0
          %1416 = vmatpush1.msra.mxu0 0.0
          %1417 = vmatprep.subr.mxu0 0.0
          %1418 = vmatpush1.msra.mxu0 0.0
          %1419 = vmatprep.subr.mxu0 0.0
          %1420 = vmatpush1.msra.mxu0 0.0
          %1421 = vmatprep.subr.mxu0 0.0
          %1422 = vmatpush1.msra.mxu0 0.0
          %1423 = vmatprep.subr.mxu0 0.0
          %1424 = vmatpush1.msra.mxu0 0.0
          %1425 = vmatprep.subr.mxu0 0.0
          %1426 = vmatpush1.msra.mxu0 0.0
          %1427 = vmatprep.mubr.f32.mxu0 0.0
          %v1428 = vand.u32 %v1065, 4294901760
          %v1429 = vsub.f32 %v1065, %v1428
          %1430 = vmatmul.mubr.f32.gmra.mrb[0].mxu0 %v1429
          %v1431 = vpop.f32.mrb[0].mxu0
          %v1432 = vadd.f32 %v1328, %v1431
          %v1433 = vpop.f32.mrb[0].mxu0
          %1434 = vdwg.mxu0
          %1435 = vmatprep.subr.mxu0 0.0
          %v1436 = vand.u32 %v1066, 4294901760
          %1437 = vmatpush1.msra.mxu0 %v1436
          %1438 = vmatprep.subr.mxu0 0.0
          %v1439 = vand.u32 %v1067, 4294901760
          %1440 = vmatpush1.msra.mxu0 %v1439
          %1441 = vmatprep.subr.mxu0 0.0
          %v1442 = vand.u32 %v1068, 4294901760
          %1443 = vmatpush1.msra.mxu0 %v1442
          %1444 = vmatprep.subr.mxu0 0.0
          %v1445 = vand.u32 %v1069, 4294901760
          %1446 = vmatpush1.msra.mxu0 %v1445
          %1447 = vmatprep.subr.mxu0 0.0
          %v1448 = vand.u32 %v1070, 4294901760
          %1449 = vmatpush1.msra.mxu0 %v1448
          %1450 = vmatprep.subr.mxu0 0.0
          %v1451 = vand.u32 %v1071, 4294901760
          %1452 = vmatpush1.msra.mxu0 %v1451
          %1453 = vmatprep.subr.mxu0 0.0
          %v1454 = vand.u32 %v1072, 4294901760
          %1455 = vmatpush1.msra.mxu0 %v1454
          %1456 = vmatprep.subr.mxu0 0.0
          %v1457 = vand.u32 %v1073, 4294901760
          %1458 = vmatpush1.msra.mxu0 %v1457
          %1459 = vmatprep.subr.mxu0 0.0
          %v1460 = vand.u32 %v1074, 4294901760
          %1461 = vmatpush1.msra.mxu0 %v1460
          %1462 = vmatprep.subr.mxu0 0.0
          %v1463 = vand.u32 %v1075, 4294901760
          %1464 = vmatpush1.msra.mxu0 %v1463
          %1465 = vmatprep.subr.mxu0 0.0
          %v1466 = vand.u32 %v1076, 4294901760
          %1467 = vmatpush1.msra.mxu0 %v1466
          %1468 = vmatprep.subr.mxu0 0.0
          %v1469 = vand.u32 %v1077, 4294901760
          %1470 = vmatpush1.msra.mxu0 %v1469
          %1471 = vmatprep.subr.mxu0 0.0
          %v1472 = vand.u32 %v1078, 4294901760
          %1473 = vmatpush1.msra.mxu0 %v1472
          %1474 = vmatprep.subr.mxu0 0.0
          %v1475 = vand.u32 %v1079, 4294901760
          %1476 = vmatpush1.msra.mxu0 %v1475
          %1477 = vmatprep.subr.mxu0 0.0
          %v1478 = vand.u32 %v1080, 4294901760
          %1479 = vmatpush1.msra.mxu0 %v1478
          %1480 = vmatprep.subr.mxu0 0.0
          %v1481 = vand.u32 %v1081, 4294901760
          %1482 = vmatpush1.msra.mxu0 %v1481
          %1483 = vmatprep.subr.mxu0 0.0
          %1484 = vmatpush1.msra.mxu0 0.0
          %1485 = vmatprep.subr.mxu0 0.0
          %1486 = vmatpush1.msra.mxu0 0.0
          %1487 = vmatprep.subr.mxu0 0.0
          %1488 = vmatpush1.msra.mxu0 0.0
          %1489 = vmatprep.subr.mxu0 0.0
          %1490 = vmatpush1.msra.mxu0 0.0
          %1491 = vmatprep.subr.mxu0 0.0
          %1492 = vmatpush1.msra.mxu0 0.0
          %1493 = vmatprep.subr.mxu0 0.0
          %1494 = vmatpush1.msra.mxu0 0.0
          %1495 = vmatprep.subr.mxu0 0.0
          %1496 = vmatpush1.msra.mxu0 0.0
          %1497 = vmatprep.subr.mxu0 0.0
          %1498 = vmatpush1.msra.mxu0 0.0
          %1499 = vmatprep.subr.mxu0 0.0
          %1500 = vmatpush1.msra.mxu0 0.0
          %1501 = vmatprep.subr.mxu0 0.0
          %1502 = vmatpush1.msra.mxu0 0.0
          %1503 = vmatprep.subr.mxu0 0.0
          %1504 = vmatpush1.msra.mxu0 0.0
          %1505 = vmatprep.subr.mxu0 0.0
          %1506 = vmatpush1.msra.mxu0 0.0
          %1507 = vmatprep.subr.mxu0 0.0
          %1508 = vmatpush1.msra.mxu0 0.0
          %1509 = vmatprep.subr.mxu0 0.0
          %1510 = vmatpush1.msra.mxu0 0.0
          %1511 = vmatprep.subr.mxu0 0.0
          %1512 = vmatpush1.msra.mxu0 0.0
          %1513 = vmatprep.subr.mxu0 0.0
          %1514 = vmatpush1.msra.mxu0 0.0
          %1515 = vmatprep.mubr.f32.mxu0 0.0
          %v1516 = vand.u32 %v1065, 4294901760
          %v1517 = vsub.f32 %v1065, %v1516
          %v1518 = vand.u32 %v1517, 4294901760
          %1519 = vmatmul.mubr.f32.gmra.mrb[0].mxu0 %v1518
          %v1520 = vpop.f32.mrb[0].mxu0
          %v1521 = vadd.f32 %v1432, %v1520
          %v1522 = vpop.f32.mrb[0].mxu0
          %1523 = vdwg.mxu0
          %1524 = vmatprep.subr.mxu0 0.0
          %v1525 = vand.u32 %v1066, 4294901760
          %v1526 = vsub.f32 %v1066, %v1525
          %v1527 = vand.u32 %v1526, 4294901760
          %1528 = vmatpush1.msra.mxu0 %v1527
          %1529 = vmatprep.subr.mxu0 0.0
          %v1530 = vand.u32 %v1067, 4294901760
          %v1531 = vsub.f32 %v1067, %v1530
          %v1532 = vand.u32 %v1531, 4294901760
          %1533 = vmatpush1.msra.mxu0 %v1532
          %1534 = vmatprep.subr.mxu0 0.0
          %v1535 = vand.u32 %v1068, 4294901760
          %v1536 = vsub.f32 %v1068, %v1535
          %v1537 = vand.u32 %v1536, 4294901760
          %1538 = vmatpush1.msra.mxu0 %v1537
          %1539 = vmatprep.subr.mxu0 0.0
          %v1540 = vand.u32 %v1069, 4294901760
          %v1541 = vsub.f32 %v1069, %v1540
          %v1542 = vand.u32 %v1541, 4294901760
          %1543 = vmatpush1.msra.mxu0 %v1542
          %1544 = vmatprep.subr.mxu0 0.0
          %v1545 = vand.u32 %v1070, 4294901760
          %v1546 = vsub.f32 %v1070, %v1545
          %v1547 = vand.u32 %v1546, 4294901760
          %1548 = vmatpush1.msra.mxu0 %v1547
          %1549 = vmatprep.subr.mxu0 0.0
          %v1550 = vand.u32 %v1071, 4294901760
          %v1551 = vsub.f32 %v1071, %v1550
          %v1552 = vand.u32 %v1551, 4294901760
          %1553 = vmatpush1.msra.mxu0 %v1552
          %1554 = vmatprep.subr.mxu0 0.0
          %v1555 = vand.u32 %v1072, 4294901760
          %v1556 = vsub.f32 %v1072, %v1555
          %v1557 = vand.u32 %v1556, 4294901760
          %1558 = vmatpush1.msra.mxu0 %v1557
          %1559 = vmatprep.subr.mxu0 0.0
          %v1560 = vand.u32 %v1073, 4294901760
          %v1561 = vsub.f32 %v1073, %v1560
          %v1562 = vand.u32 %v1561, 4294901760
          %1563 = vmatpush1.msra.mxu0 %v1562
          %1564 = vmatprep.subr.mxu0 0.0
          %v1565 = vand.u32 %v1074, 4294901760
          %v1566 = vsub.f32 %v1074, %v1565
          %v1567 = vand.u32 %v1566, 4294901760
          %1568 = vmatpush1.msra.mxu0 %v1567
          %1569 = vmatprep.subr.mxu0 0.0
          %v1570 = vand.u32 %v1075, 4294901760
          %v1571 = vsub.f32 %v1075, %v1570
          %v1572 = vand.u32 %v1571, 4294901760
          %1573 = vmatpush1.msra.mxu0 %v1572
          %1574 = vmatprep.subr.mxu0 0.0
          %v1575 = vand.u32 %v1076, 4294901760
          %v1576 = vsub.f32 %v1076, %v1575
          %v1577 = vand.u32 %v1576, 4294901760
          %1578 = vmatpush1.msra.mxu0 %v1577
          %1579 = vmatprep.subr.mxu0 0.0
          %v1580 = vand.u32 %v1077, 4294901760
          %v1581 = vsub.f32 %v1077, %v1580
          %v1582 = vand.u32 %v1581, 4294901760
          %1583 = vmatpush1.msra.mxu0 %v1582
          %1584 = vmatprep.subr.mxu0 0.0
          %v1585 = vand.u32 %v1078, 4294901760
          %v1586 = vsub.f32 %v1078, %v1585
          %v1587 = vand.u32 %v1586, 4294901760
          %1588 = vmatpush1.msra.mxu0 %v1587
          %1589 = vmatprep.subr.mxu0 0.0
          %v1590 = vand.u32 %v1079, 4294901760
          %v1591 = vsub.f32 %v1079, %v1590
          %v1592 = vand.u32 %v1591, 4294901760
          %1593 = vmatpush1.msra.mxu0 %v1592
          %1594 = vmatprep.subr.mxu0 0.0
          %v1595 = vand.u32 %v1080, 4294901760
          %v1596 = vsub.f32 %v1080, %v1595
          %v1597 = vand.u32 %v1596, 4294901760
          %1598 = vmatpush1.msra.mxu0 %v1597
          %1599 = vmatprep.subr.mxu0 0.0
          %v1600 = vand.u32 %v1081, 4294901760
          %v1601 = vsub.f32 %v1081, %v1600
          %v1602 = vand.u32 %v1601, 4294901760
          %1603 = vmatpush1.msra.mxu0 %v1602
          %1604 = vmatprep.subr.mxu0 0.0
          %1605 = vmatpush1.msra.mxu0 0.0
          %1606 = vmatprep.subr.mxu0 0.0
          %1607 = vmatpush1.msra.mxu0 0.0
          %1608 = vmatprep.subr.mxu0 0.0
          %1609 = vmatpush1.msra.mxu0 0.0
          %1610 = vmatprep.subr.mxu0 0.0
          %1611 = vmatpush1.msra.mxu0 0.0
          %1612 = vmatprep.subr.mxu0 0.0
          %1613 = vmatpush1.msra.mxu0 0.0
          %1614 = vmatprep.subr.mxu0 0.0
          %1615 = vmatpush1.msra.mxu0 0.0
          %1616 = vmatprep.subr.mxu0 0.0
          %1617 = vmatpush1.msra.mxu0 0.0
          %1618 = vmatprep.subr.mxu0 0.0
          %1619 = vmatpush1.msra.mxu0 0.0
          %1620 = vmatprep.subr.mxu0 0.0
          %1621 = vmatpush1.msra.mxu0 0.0
          %1622 = vmatprep.subr.mxu0 0.0
          %1623 = vmatpush1.msra.mxu0 0.0
          %1624 = vmatprep.subr.mxu0 0.0
          %1625 = vmatpush1.msra.mxu0 0.0
          %1626 = vmatprep.subr.mxu0 0.0
          %1627 = vmatpush1.msra.mxu0 0.0
          %1628 = vmatprep.subr.mxu0 0.0
          %1629 = vmatpush1.msra.mxu0 0.0
          %1630 = vmatprep.subr.mxu0 0.0
          %1631 = vmatpush1.msra.mxu0 0.0
          %1632 = vmatprep.subr.mxu0 0.0
          %1633 = vmatpush1.msra.mxu0 0.0
          %1634 = vmatprep.subr.mxu0 0.0
          %1635 = vmatpush1.msra.mxu0 0.0
          %1636 = vmatprep.mubr.f32.mxu0 0.0
          %v1637 = vand.u32 %v1065, 4294901760
          %1638 = vmatmul.mubr.f32.gmra.mrb[0].mxu0 %v1637
          %v1639 = vpop.f32.mrb[0].mxu0
          %v1640 = vadd.f32 %v1521, %v1639
          %v1641 = vpop.f32.mrb[0].mxu0
          %1642 = vdwg.mxu0
          %1643 = vmatprep.subr.mxu0 0.0
          %v1644 = vand.u32 %v1066, 4294901760
          %1645 = vmatpush1.msra.mxu0 %v1644
          %1646 = vmatprep.subr.mxu0 0.0
          %v1647 = vand.u32 %v1067, 4294901760
          %1648 = vmatpush1.msra.mxu0 %v1647
          %1649 = vmatprep.subr.mxu0 0.0
          %v1650 = vand.u32 %v1068, 4294901760
          %1651 = vmatpush1.msra.mxu0 %v1650
          %1652 = vmatprep.subr.mxu0 0.0
          %v1653 = vand.u32 %v1069, 4294901760
          %1654 = vmatpush1.msra.mxu0 %v1653
          %1655 = vmatprep.subr.mxu0 0.0
          %v1656 = vand.u32 %v1070, 4294901760
          %1657 = vmatpush1.msra.mxu0 %v1656
          %1658 = vmatprep.subr.mxu0 0.0
          %v1659 = vand.u32 %v1071, 4294901760
          %1660 = vmatpush1.msra.mxu0 %v1659
          %1661 = vmatprep.subr.mxu0 0.0
          %v1662 = vand.u32 %v1072, 4294901760
          %1663 = vmatpush1.msra.mxu0 %v1662
          %1664 = vmatprep.subr.mxu0 0.0
          %v1665 = vand.u32 %v1073, 4294901760
          %1666 = vmatpush1.msra.mxu0 %v1665
          %1667 = vmatprep.subr.mxu0 0.0
          %v1668 = vand.u32 %v1074, 4294901760
          %1669 = vmatpush1.msra.mxu0 %v1668
          %1670 = vmatprep.subr.mxu0 0.0
          %v1671 = vand.u32 %v1075, 4294901760
          %1672 = vmatpush1.msra.mxu0 %v1671
          %1673 = vmatprep.subr.mxu0 0.0
          %v1674 = vand.u32 %v1076, 4294901760
          %1675 = vmatpush1.msra.mxu0 %v1674
          %1676 = vmatprep.subr.mxu0 0.0
          %v1677 = vand.u32 %v1077, 4294901760
          %1678 = vmatpush1.msra.mxu0 %v1677
          %1679 = vmatprep.subr.mxu0 0.0
          %v1680 = vand.u32 %v1078, 4294901760
          %1681 = vmatpush1.msra.mxu0 %v1680
          %1682 = vmatprep.subr.mxu0 0.0
          %v1683 = vand.u32 %v1079, 4294901760
          %1684 = vmatpush1.msra.mxu0 %v1683
          %1685 = vmatprep.subr.mxu0 0.0
          %v1686 = vand.u32 %v1080, 4294901760
          %1687 = vmatpush1.msra.mxu0 %v1686
          %1688 = vmatprep.subr.mxu0 0.0
          %v1689 = vand.u32 %v1081, 4294901760
          %1690 = vmatpush1.msra.mxu0 %v1689
          %1691 = vmatprep.subr.mxu0 0.0
          %1692 = vmatpush1.msra.mxu0 0.0
          %1693 = vmatprep.subr.mxu0 0.0
          %1694 = vmatpush1.msra.mxu0 0.0
          %1695 = vmatprep.subr.mxu0 0.0
          %1696 = vmatpush1.msra.mxu0 0.0
          %1697 = vmatprep.subr.mxu0 0.0
          %1698 = vmatpush1.msra.mxu0 0.0
          %1699 = vmatprep.subr.mxu0 0.0
          %1700 = vmatpush1.msra.mxu0 0.0
          %1701 = vmatprep.subr.mxu0 0.0
          %1702 = vmatpush1.msra.mxu0 0.0
          %1703 = vmatprep.subr.mxu0 0.0
          %1704 = vmatpush1.msra.mxu0 0.0
          %1705 = vmatprep.subr.mxu0 0.0
          %1706 = vmatpush1.msra.mxu0 0.0
          %1707 = vmatprep.subr.mxu0 0.0
          %1708 = vmatpush1.msra.mxu0 0.0
          %1709 = vmatprep.subr.mxu0 0.0
          %1710 = vmatpush1.msra.mxu0 0.0
          %1711 = vmatprep.subr.mxu0 0.0
          %1712 = vmatpush1.msra.mxu0 0.0
          %1713 = vmatprep.subr.mxu0 0.0
          %1714 = vmatpush1.msra.mxu0 0.0
          %1715 = vmatprep.subr.mxu0 0.0
          %1716 = vmatpush1.msra.mxu0 0.0
          %1717 = vmatprep.subr.mxu0 0.0
          %1718 = vmatpush1.msra.mxu0 0.0
          %1719 = vmatprep.subr.mxu0 0.0
          %1720 = vmatpush1.msra.mxu0 0.0
          %1721 = vmatprep.subr.mxu0 0.0
          %1722 = vmatpush1.msra.mxu0 0.0
          %1723 = vmatprep.mubr.f32.mxu0 0.0
          %v1724 = vand.u32 %v1065, 4294901760
          %1725 = vmatmul.mubr.f32.gmra.mrb[0].mxu0 %v1724
          %v1726 = vpop.f32.mrb[0].mxu0
          %v1727 = vadd.f32 %v1640, %v1726
          %v1728 = vpop.f32.mrb[0].mxu0
          %1729 = vdwg.mxu0
          %v1730 = vtanh.pop %v1727
          %v1733 = vunpack.c.l.s4 1966171168
          %v1734 = vunpack.c.0.s8 %v1733
          %v1735 = vlaneseq
          %v1736 = vshrl.u32 %v1735, 7
          %v1737 = vsub.s32 %v1734, %v1736
          %v1738 = vrot.slane %v1730, %v1737
          %v1739 = vcombine.high %v1738, %v1738
          %v1741 = vunpack.c.l.s4 1966171168
          %v1742 = vunpack.c.0.s8 %v1741
          %v1743 = vlaneseq
          %v1744 = vshrl.u32 %v1743, 7
          %v1745 = vsub.s32 %v1742, %v1744
          %v1746 = vrot.slane %v1738, %v1745
          %v1748 = vunpack.c.l.s4 1966171168
          %v1749 = vunpack.c.0.s8 %v1748
          %v1750 = vlaneseq
          %v1751 = vshrl.u32 %v1750, 7
          %v1752 = vsub.s32 %v1749, %v1751
          %v1753 = vrot.slane %v1739, %v1752
          %1756 = vst [vmem:[#allocation9] sm:$0x1] %v1746
          %1757 = vst [vmem:[#allocation9 + $0x1] sm:$0x1] %v1753
        $region68: #{tpu_custom_call.1} parent=47 // pred_fallthru
          _
        // Predicated region
        $region69: #{tpu_custom_call.1} parent=47 // pred_check
          %p1758 = pneg %p207
        $region70: #{tpu_custom_call.1} parent=47 // pred_check_branch
          %1760 = sbr.rel (%p1758) target = $region72
        $region71: #{tpu_custom_call.1} parent=47 // pred_region
          %s1761 = smul.u32 2, %s27
          %s1763 = ssub.s32 32, 32
          %1764 = vsyncadd [#allocation5], %s1763
          %s1765 = smul.addr %s1761, 16
          %s1766 = scalar_lea.hbm %s7, %s1765
          %s1767 = sshll.u32 [#allocation9], 4
          %s1768 = int_to_ptr.vmem [resolvable:$true] %s1767
          %1773 = dma.vmem_to_hbm [thread:$0]  %s1768, 32, %s1766, [#allocation5], 16, 16, 1
        $region72: #{tpu_custom_call.1} parent=47 // pred_fallthru
          _
        // Predicated region
        $region73: #{tpu_custom_call.1} parent=47 // pred_check
          %p1774 = pneg %p207
        $region74: #{tpu_custom_call.1} parent=47 // pred_check_branch
          %1776 = sbr.rel (%p1774) target = $region76
        $region75: #{tpu_custom_call.1} parent=47 // pred_region
          %1777 = dma.done [#allocation5], 32
        $region76: #{tpu_custom_call.1} parent=47 // pred_fallthru
          _
      $region48: #{tpu_custom_call.1} parent=5 // pred_fallthru
        _
      %p1778 = scmp.le.s32.totalorder 2, %s18
      // Predicated region
      $region77: #{tpu_custom_call.1} parent=5 // pred_check
        %p1779 = pneg %p1778
      $region78: #{tpu_custom_call.1} parent=5 // pred_check_branch
        %1781 = sbr.rel (%p1779) target = $region80
      $region79: #{tpu_custom_call.1} parent=5 // pred_region
        %s1782 = ssub.s32 %s18, 2
      $region80: #{tpu_custom_call.1} parent=5 // pred_fallthru
        _
    $region6: #{tpu_custom_call.1} parent=1 // loop_footer
      %s22 = sadd.s32 1, %s18
    $region7: #{tpu_custom_call.1} parent=1 // loop_footer_branch
      %17 = sbr.rel target = $region3
    $region8: #{tpu_custom_call.1} parent=1 // loop_exit
      _
    %1783 = vsyncpa [#allocation4], 1
    %s1784 = scalar_lea.sflag [#allocation4], 1
    %1785 = vsyncpa %s1784, 1
    %1786 = vsyncpa [#allocation7], 1
    %1787 = vsyncpa [#allocation5], 1
    %s1788 = scalar_lea.sflag [#allocation5], 1
    %1789 = vsyncpa %s1788, 1

</llo_original>
